<compile_context>
chip_gen: v7x
topology: tpu7x:2x2x1
jax: 0.10.0
libtpu: 0.0.40
codegen_flags: <defaults>
</compile_context>

<pallas_src>
import functools

import jax
import jax.numpy as jnp
from jax.experimental import pallas as pl
from jax.experimental.pallas import tpu as pltpu


EPS = 1e-3
MXU_DTYPE = jnp.bfloat16      # MXU-native on v5e/v6e/v7x; accumulation stays f32
NUM_STATS_SHARDS = 2          # pass-1 accumulator split (uses both TCs on v7x)


def _round_up(a, m):
    return ((a + m - 1) // m) * m


def _tuning():
    """Generation-aware (pillars-per-tile, vmem_limit_bytes)."""
    kind = ""
    try:
        kind = jax.devices()[0].device_kind.lower()
    except Exception:
        pass
    if ("v5" in kind) or ("v6" in kind):
        # 128 MiB physical VMEM -> big tiles, generous scoped budget.
        return 512, 96 * 1024 * 1024
    # v7x (64 MiB physical VMEM), v4, or unknown -> conservative.
    return 256, 48 * 1024 * 1024


def _linear_pair(x_block, wc_ref, w1b_ref, c_out):
    """Fused first-layer matmul: one MXU pass computes [linear(x) | linear1[0](x)].

    x_block and the weight refs are already bf16 (cast once in the wrapper);
    accumulation is f32 via preferred_element_type.
    """
    xw = jnp.dot(x_block, wc_ref[...], preferred_element_type=jnp.float32)
    x = xw[:, :c_out]                               # self.linear(inputs)
    h = jnp.maximum(xw[:, c_out:], 0.0)             # linear1[0] -> ReLU
    gate = jax.nn.sigmoid(                          # linear1[2] -> Sigmoid
        jnp.dot(h.astype(MXU_DTYPE), w1b_ref[...],
                preferred_element_type=jnp.float32))
    return x, x * gate                              # (x, x_a = x * linear1(inputs))


def _stats_kernel(x_ref, wc_ref, w1b_ref, stats_ref, acc_ref, *, c_out):
    """Pass 1: per-shard per-channel [sum_x, sumsq_x, sum_xa, sumsq_xa]."""
    step = pl.program_id(1)

    @pl.when(step == 0)
    def _init():
        acc_ref[...] = jnp.zeros_like(acc_ref)

    x, x_a = _linear_pair(x_ref[...], wc_ref, w1b_ref, c_out)
    # Targeted row accumulations into a VMEM scratch (no per-step concat, no
    # masked RMW of a sub-(8,128) output block).
    acc_ref[0:1, :] = acc_ref[0:1, :] + jnp.sum(x, axis=0, keepdims=True)
    acc_ref[1:2, :] = acc_ref[1:2, :] + jnp.sum(x * x, axis=0, keepdims=True)
    acc_ref[2:3, :] = acc_ref[2:3, :] + jnp.sum(x_a, axis=0, keepdims=True)
    acc_ref[3:4, :] = acc_ref[3:4, :] + jnp.sum(x_a * x_a, axis=0, keepdims=True)

    @pl.when(step == pl.num_programs(1) - 1)
    def _finalize():
        stats_ref[...] = acc_ref[0:4, :].reshape(1, 4, c_out)


def _apply_kernel(x_ref, wc_ref, w1b_ref, ss_ref, out_ref, *,
                  c_out, n_points, tile_p):
    """Pass 2: folded-BN scale/shift + ReLU, per-pillar mean(x_a) + max(x)."""
    x, x_a = _linear_pair(x_ref[...], wc_ref, w1b_ref, c_out)
    ss = ss_ref[...]                                            # (4, C_out) f32
    x = jnp.maximum(x * ss[0:1, :] + ss[1:2, :], 0.0)           # relu(norm(x))
    x_a = jnp.maximum(x_a * ss[2:3, :] + ss[3:4, :], 0.0)       # relu(norm1(x_a))

    x3 = x.reshape(tile_p, n_points, c_out)                     # sublane split: free
    xa3 = x_a.reshape(tile_p, n_points, c_out)
    out_ref[...] = jnp.mean(xa3, axis=1) + jnp.max(x3, axis=1)


def pfn_layer2_forward(inputs, w, w1a, w1b, gamma, beta, gamma1, beta1):
    """inputs: (B, N, C_in) f32  ->  (B, 1, C_out) f32 (last_vfe=True branch)."""
    B, N, Cin = inputs.shape
    Cout = w.shape[1]
    hid = w1a.shape[1]

    tile_p_target, vmem_limit = _tuning()
    tile_p = min(tile_p_target, _round_up(B, 16))   # pillars per grid step
    tile_rows = tile_p * N
    assert tile_rows % 16 == 0 and tile_p % 8 == 0, (tile_p, N)

    steps_per_shard = pl.cdiv(pl.cdiv(B, tile_p), NUM_STATS_SHARDS)
    total_steps = steps_per_shard * NUM_STATS_SHARDS
    b_pad = total_steps * tile_p

    # bf16 once in the wrapper: halves input DMA bytes and feeds the MXU natively.
    x2d = inputs.reshape(B * N, Cin).astype(MXU_DTYPE)
    if b_pad != B:
        # Zero pillars give x = 0 and x_a = 0, so they add nothing to the BN
        # sums; their garbage pass-2 outputs are sliced off below.
        x2d = jnp.pad(x2d, ((0, (b_pad - B) * N), (0, 0)))

    wc = jnp.concatenate([w, w1a], axis=1).astype(MXU_DTYPE)    # (Cin, Cout+hid)
    w1b_c = w1b.astype(MXU_DTYPE)                               # (hid, Cout)

    # ---- pass 1: per-core-sharded per-channel sum / sum-of-squares ----------
    stats = pl.pallas_call(
        functools.partial(_stats_kernel, c_out=Cout),
        out_shape=jax.ShapeDtypeStruct((NUM_STATS_SHARDS, 4, Cout), jnp.float32),
        grid=(NUM_STATS_SHARDS, steps_per_shard),
        in_specs=[
            pl.BlockSpec((tile_rows, Cin),
                         lambda c, i: (c * steps_per_shard + i, 0)),
            pl.BlockSpec((Cin, Cout + hid), lambda c, i: (0, 0)),
            pl.BlockSpec((hid, Cout), lambda c, i: (0, 0)),
        ],
        out_specs=pl.BlockSpec((1, 4, Cout), lambda c, i: (c, 0, 0)),
        scratch_shapes=[pltpu.VMEM((8, Cout), jnp.float32)],
        compiler_params=pltpu.CompilerParams(
            dimension_semantics=("parallel", "arbitrary"),
            vmem_limit_bytes=vmem_limit),
    )(x2d, wc, w1b_c)

    # Tiny JAX glue: combine the per-core partials and fold training-mode BN
    # (biased variance, eps=1e-3) into one per-channel scale/shift array.
    # NOTE: E[x^2]-E[x]^2 in f32 is adequate at these sizes; for >~1e6 rows a
    # mean-shifted / Welford combination would be preferable.
    stats = jnp.sum(stats, axis=0)                               # (4, Cout)
    cnt = float(B * N)
    mean = stats[0::2, :] / cnt                                  # [mean_x, mean_xa]
    var = jnp.maximum(stats[1::2, :] / cnt - mean * mean, 0.0)   # biased variance
    g = jnp.concatenate([gamma.reshape(1, -1), gamma1.reshape(1, -1)], axis=0)
    bt = jnp.concatenate([beta.reshape(1, -1), beta1.reshape(1, -1)], axis=0)
    scale = g * jax.lax.rsqrt(var + EPS)
    shift = bt - mean * scale
    ss = jnp.stack([scale[0], shift[0], scale[1], shift[1]], axis=0)  # (4, Cout)

    # ---- pass 2: recompute matmuls, scale/shift + ReLU, per-pillar mean/max --
    out = pl.pallas_call(
        functools.partial(_apply_kernel, c_out=Cout, n_points=N, tile_p=tile_p),
        out_shape=jax.ShapeDtypeStruct((b_pad, Cout), jnp.float32),
        grid=(total_steps,),
        in_specs=[
            pl.BlockSpec((tile_rows, Cin), lambda i: (i, 0)),
            pl.BlockSpec((Cin, Cout + hid), lambda i: (0, 0)),
            pl.BlockSpec((hid, Cout), lambda i: (0, 0)),
            pl.BlockSpec((4, Cout), lambda i: (0, 0)),
        ],
        out_specs=pl.BlockSpec((tile_p, Cout), lambda i: (i, 0)),
        compiler_params=pltpu.CompilerParams(
            dimension_semantics=("parallel",),
            vmem_limit_bytes=vmem_limit),
    )(x2d, wc, w1b_c, ss)

    return out[:B].reshape(B, 1, Cout)


def pfn_layer2_reference(inputs, w, w1a, w1b, gamma, beta, gamma1, beta1):
    """Pure-JAX f32 reference mirroring the torch forward (training-mode BN)."""
    x = inputs @ w
    x_a = jax.nn.sigmoid(jnp.maximum(inputs @ w1a, 0.0) @ w1b)
    x_a = x * x_a

    def bn(y, g, b):
        mu = jnp.mean(y, axis=(0, 1), keepdims=True)
        var = jnp.mean((y - mu) ** 2, axis=(0, 1), keepdims=True)
        return (y - mu) / jnp.sqrt(var + EPS) * g.reshape(1, 1, -1) + b.reshape(1, 1, -1)

    x_a = jnp.maximum(bn(x_a, gamma1, beta1), 0.0)
    x_a = jnp.mean(x_a, axis=1, keepdims=True)
    x = jnp.maximum(bn(x, gamma, beta), 0.0)
    x_max = jnp.max(x, axis=1, keepdims=True)
    return x_a + x_max


def _check(out, ref, shape, tag):
    assert out.shape == shape, (tag, out.shape)
    # bf16 MXU operands vs f32 reference => relaxed (but still tight) tolerance.
    assert jnp.allclose(out, ref, atol=5e-2, rtol=5e-2), (
        f"{tag}: max abs err {jnp.max(jnp.abs(out - ref))}")


if __name__ == "__main__":
    # Small shapes consistent with the module: pillars of points.
    B, N, C_IN, C_OUT = 2, 32, 16, 32        # last_layer=True -> out stays C_OUT
    HID = C_OUT // 2

    key = jax.random.PRNGKey(0)
    k_in, k_w, k_w1a, k_w1b, k_big, k_huge = jax.random.split(key, 6)

    inputs = jax.random.normal(k_in, (B, N, C_IN), dtype=jnp.float32)

    # Deterministic synthetic parameters (module __init__ shapes; no checkpoint).
    w = 0.1 * jax.random.normal(k_w, (C_IN, C_OUT), dtype=jnp.float32)     # linear
    w1a = 0.1 * jax.random.normal(k_w1a, (C_IN, HID), dtype=jnp.float32)   # linear1[0]
    w1b = 0.1 * jax.random.normal(k_w1b, (HID, C_OUT), dtype=jnp.float32)  # linear1[2]
    gamma = jnp.ones((1, C_OUT), dtype=jnp.float32)    # BN defaults: weight=1
    beta = jnp.zeros((1, C_OUT), dtype=jnp.float32)    #              bias=0
    gamma1 = jnp.ones((1, C_OUT), dtype=jnp.float32)
    beta1 = jnp.zeros((1, C_OUT), dtype=jnp.float32)

    params = (w, w1a, w1b, gamma, beta, gamma1, beta1)

    # Tiny case.
    out = jax.block_until_ready(pfn_layer2_forward(inputs, *params))
    ref = pfn_layer2_reference(inputs, *params)
    _check(out, ref, (B, 1, C_OUT), "small")

    # Exercises the 2-shard stats grid and padded-pillar handling (B % tile != 0).
    B2 = 130
    inputs2 = jax.random.normal(k_big, (B2, N, C_IN), dtype=jnp.float32)
    out2 = jax.block_until_ready(pfn_layer2_forward(inputs2, *params))
    ref2 = pfn_layer2_reference(inputs2, *params)
    _check(out2, ref2, (B2, 1, C_OUT), "padded")

    # Exercises multiple grid steps per stats shard (accumulator init/finalize).
    B3 = 1200
    inputs3 = jax.random.normal(k_huge, (B3, N, C_IN), dtype=jnp.float32)
    out3 = jax.block_until_ready(pfn_layer2_forward(inputs3, *params))
    ref3 = pfn_layer2_reference(inputs3, *params)
    _check(out3, ref3, (B3, 1, C_OUT), "multi-step")

    print("KERNEL_OK")
</pallas_src>

<mosaic_0001>
module attributes {stable_mosaic.version = 11 : i64} {
  func.func @_stats_kernel(%arg0: i32, %arg1: i32, %arg2: memref<512x16xbf16, #tpu.memory_space<vmem>>, %arg3: memref<16x48xbf16, #tpu.memory_space<vmem>>, %arg4: memref<16x32xbf16, #tpu.memory_space<vmem>>, %arg5: memref<1x4x32xf32, #tpu.memory_space<vmem>>, %arg6: memref<8x32xf32, #tpu.memory_space<vmem>>) attributes {dimension_semantics = [#tpu.dimension_semantics<parallel>, #tpu.dimension_semantics<arbitrary>], iteration_bounds = array<i64: 2, 1>, scalar_prefetch = 0 : i64, scratch_operands = 1 : i64, tpu.core_type = #tpu.core_type<tc>, window_params = [{transform_indices = @transform_0, window_bounds = array<i64: 512, 16>}, {pipeline_mode = #tpu.pipeline_mode<synchronous>, transform_indices = @transform_1, window_bounds = array<i64: 16, 48>}, {pipeline_mode = #tpu.pipeline_mode<synchronous>, transform_indices = @transform_2, window_bounds = array<i64: 16, 32>}, {transform_indices = @transform_3, window_bounds = array<i64: 1, 4, 32>}]} {
    %c0_i32 = arith.constant 0 : i32
    %0 = arith.cmpi eq, %arg1, %c0_i32 : i32
    %1 = arith.extui %0 : i1 to i32
    %c0_i32_0 = arith.constant 0 : i32
    %2 = arith.cmpi ne, %1, %c0_i32_0 : i32
    scf.if %2 {
      %cst_28 = arith.constant 0.000000e+00 : f32
      %44 = vector.broadcast %cst_28 : f32 to vector<8x32xf32>
      %c0_29 = arith.constant 0 : index
      %c0_30 = arith.constant 0 : index
      %45 = vector.load %arg6[%c0_29, %c0_30] : memref<8x32xf32, #tpu.memory_space<vmem>>, vector<8x32xf32>
      tpu.vector_store %arg6[%c0_29, %c0_30], %44 {strides = array<i32>} : memref<8x32xf32, #tpu.memory_space<vmem>>, vector<8x32xf32>,
    } else {
    }
    %c0 = arith.constant 0 : index
    %c0_1 = arith.constant 0 : index
    %3 = vector.load %arg2[%c0, %c0_1] : memref<512x16xbf16, #tpu.memory_space<vmem>>, vector<512x16xbf16>
    %c0_2 = arith.constant 0 : index
    %c0_3 = arith.constant 0 : index
    %4 = vector.load %arg3[%c0_2, %c0_3] : memref<16x48xbf16, #tpu.memory_space<vmem>>, vector<16x48xbf16>
    %cst = arith.constant dense<0.000000e+00> : vector<512x48xf32>
    %5 = tpu.matmul %3, %4, %cst {dimension_numbers = #tpu.dot_dimension_numbers<[1], [0], [0], [1], [0, 0, 1, 1], [], []>} : vector<512x16xbf16>, vector<16x48xbf16>, vector<512x48xf32> -> vector<512x48xf32>
    %6 = vector.extract_strided_slice %5 {offsets = [0, 0], sizes = [512, 32], strides = [1, 1]} : vector<512x48xf32> to vector<512x32xf32>
    %7 = vector.extract_strided_slice %5 {offsets = [0, 32], sizes = [512, 16], strides = [1, 1]} : vector<512x48xf32> to vector<512x16xf32>
    %cst_4 = arith.constant 0.000000e+00 : f32
    %8 = vector.broadcast %cst_4 : f32 to vector<512x16xf32>
    %9 = arith.maximumf %7, %8 : vector<512x16xf32>
    %10 = arith.truncf %9 : vector<512x16xf32> to vector<512x16xbf16>
    %c0_5 = arith.constant 0 : index
    %c0_6 = arith.constant 0 : index
    %11 = vector.load %arg4[%c0_5, %c0_6] : memref<16x32xbf16, #tpu.memory_space<vmem>>, vector<16x32xbf16>
    %cst_7 = arith.constant dense<0.000000e+00> : vector<512x32xf32>
    %12 = tpu.matmul %10, %11, %cst_7 {dimension_numbers = #tpu.dot_dimension_numbers<[1], [0], [0], [1], [0, 0, 1, 1], [], []>} : vector<512x16xbf16>, vector<16x32xbf16>, vector<512x32xf32> -> vector<512x32xf32>
    %13 = arith.negf %12 : vector<512x32xf32>
    %14 = math.exp %13 : vector<512x32xf32>
    %cst_8 = arith.constant 1.000000e+00 : f32
    %15 = vector.broadcast %cst_8 : f32 to vector<512x32xf32>
    %16 = arith.addf %15, %14 : vector<512x32xf32>
    %17 = arith.divf %15, %16 : vector<512x32xf32>
    %18 = arith.mulf %6, %17 : vector<512x32xf32>
    %c0_9 = arith.constant 0 : index
    %c0_10 = arith.constant 0 : index
    %19 = vector.load %arg6[%c0_9, %c0_10] : memref<8x32xf32, #tpu.memory_space<vmem>>, vector<1x32xf32>
    %cst_11 = arith.constant dense<0.000000e+00> : vector<32xf32>
    %20 = vector.multi_reduction <add>, %6, %cst_11 [0] : vector<512x32xf32> to vector<32xf32>
    %21 = vector.shape_cast %20 : vector<32xf32> to vector<1x32xf32>
    %22 = arith.addf %19, %21 : vector<1x32xf32>
    %c0_12 = arith.constant 0 : index
    %c0_13 = arith.constant 0 : index
    %23 = vector.load %arg6[%c0_12, %c0_13] : memref<8x32xf32, #tpu.memory_space<vmem>>, vector<1x32xf32>
    tpu.vector_store %arg6[%c0_12, %c0_13], %22 {strides = array<i32>} : memref<8x32xf32, #tpu.memory_space<vmem>>, vector<1x32xf32>,
    %c1 = arith.constant 1 : index
    %c0_14 = arith.constant 0 : index
    %24 = vector.load %arg6[%c1, %c0_14] : memref<8x32xf32, #tpu.memory_space<vmem>>, vector<1x32xf32>
    %25 = arith.mulf %6, %6 : vector<512x32xf32>
    %cst_15 = arith.constant dense<0.000000e+00> : vector<32xf32>
    %26 = vector.multi_reduction <add>, %25, %cst_15 [0] : vector<512x32xf32> to vector<32xf32>
    %27 = vector.shape_cast %26 : vector<32xf32> to vector<1x32xf32>
    %28 = arith.addf %24, %27 : vector<1x32xf32>
    %c1_16 = arith.constant 1 : index
    %c0_17 = arith.constant 0 : index
    %29 = vector.load %arg6[%c1_16, %c0_17] : memref<8x32xf32, #tpu.memory_space<vmem>>, vector<1x32xf32>
    tpu.vector_store %arg6[%c1_16, %c0_17], %28 {strides = array<i32>} : memref<8x32xf32, #tpu.memory_space<vmem>>, vector<1x32xf32>,
    %c2 = arith.constant 2 : index
    %c0_18 = arith.constant 0 : index
    %30 = vector.load %arg6[%c2, %c0_18] : memref<8x32xf32, #tpu.memory_space<vmem>>, vector<1x32xf32>
    %cst_19 = arith.constant dense<0.000000e+00> : vector<32xf32>
    %31 = vector.multi_reduction <add>, %18, %cst_19 [0] : vector<512x32xf32> to vector<32xf32>
    %32 = vector.shape_cast %31 : vector<32xf32> to vector<1x32xf32>
    %33 = arith.addf %30, %32 : vector<1x32xf32>
    %c2_20 = arith.constant 2 : index
    %c0_21 = arith.constant 0 : index
    %34 = vector.load %arg6[%c2_20, %c0_21] : memref<8x32xf32, #tpu.memory_space<vmem>>, vector<1x32xf32>
    tpu.vector_store %arg6[%c2_20, %c0_21], %33 {strides = array<i32>} : memref<8x32xf32, #tpu.memory_space<vmem>>, vector<1x32xf32>,
    %c3 = arith.constant 3 : index
    %c0_22 = arith.constant 0 : index
    %35 = vector.load %arg6[%c3, %c0_22] : memref<8x32xf32, #tpu.memory_space<vmem>>, vector<1x32xf32>
    %36 = arith.mulf %18, %18 : vector<512x32xf32>
    %cst_23 = arith.constant dense<0.000000e+00> : vector<32xf32>
    %37 = vector.multi_reduction <add>, %36, %cst_23 [0] : vector<512x32xf32> to vector<32xf32>
    %38 = vector.shape_cast %37 : vector<32xf32> to vector<1x32xf32>
    %39 = arith.addf %35, %38 : vector<1x32xf32>
    %c3_24 = arith.constant 3 : index
    %c0_25 = arith.constant 0 : index
    %40 = vector.load %arg6[%c3_24, %c0_25] : memref<8x32xf32, #tpu.memory_space<vmem>>, vector<1x32xf32>
    tpu.vector_store %arg6[%c3_24, %c0_25], %39 {strides = array<i32>} : memref<8x32xf32, #tpu.memory_space<vmem>>, vector<1x32xf32>,
    %c0_i32_26 = arith.constant 0 : i32
    %41 = arith.cmpi eq, %arg1, %c0_i32_26 : i32
    %42 = arith.extui %41 : i1 to i32
    %c0_i32_27 = arith.constant 0 : i32
    %43 = arith.cmpi ne, %42, %c0_i32_27 : i32
    scf.if %43 {
      %c0_28 = arith.constant 0 : index
      %c0_29 = arith.constant 0 : index
      %44 = vector.load %arg6[%c0_28, %c0_29] : memref<8x32xf32, #tpu.memory_space<vmem>>, vector<4x32xf32>
      %45 = vector.shape_cast %44 : vector<4x32xf32> to vector<1x4x32xf32>
      %c0_30 = arith.constant 0 : index
      %c0_31 = arith.constant 0 : index
      %c0_32 = arith.constant 0 : index
      %46 = vector.load %arg5[%c0_30, %c0_31, %c0_32] : memref<1x4x32xf32, #tpu.memory_space<vmem>>, vector<1x4x32xf32>
      tpu.vector_store %arg5[%c0_30, %c0_31, %c0_32], %45 {strides = array<i32>} : memref<1x4x32xf32, #tpu.memory_space<vmem>>, vector<1x4x32xf32>,
    } else {
    }
    return
  }
  func.func @transform_0(%arg0: i32, %arg1: i32) -> (i32, i32) {
    %c1_i32 = arith.constant 1 : i32
    %0 = arith.muli %arg0, %c1_i32 : i32
    %1 = arith.addi %0, %arg1 : i32
    %c0_i32 = arith.constant 0 : i32
    %c0_i32_0 = arith.constant 0 : i32
    return %1, %c0_i32 : i32, i32
  }
  func.func @transform_1(%arg0: i32, %arg1: i32) -> (i32, i32) {
    %c0_i32 = arith.constant 0 : i32
    %c0_i32_0 = arith.constant 0 : i32
    %c0_i32_1 = arith.constant 0 : i32
    return %c0_i32, %c0_i32_0 : i32, i32
  }
  func.func @transform_2(%arg0: i32, %arg1: i32) -> (i32, i32) {
    %c0_i32 = arith.constant 0 : i32
    %c0_i32_0 = arith.constant 0 : i32
    %c0_i32_1 = arith.constant 0 : i32
    return %c0_i32, %c0_i32_0 : i32, i32
  }
  func.func @transform_3(%arg0: i32, %arg1: i32) -> (i32, i32, i32) {
    %c0_i32 = arith.constant 0 : i32
    %c0_i32_0 = arith.constant 0 : i32
    %c0_i32_1 = arith.constant 0 : i32
    return %arg0, %c0_i32, %c0_i32_0 : i32, i32, i32
  }
}

</mosaic_0001>

<llo_original>
// kernel: tpu_custom_call.1
$region0: #{tpu_custom_call.1}
  #allocation0 [shape = 'u32[]', space=smem, size = 0x4, offset = 0x4, fixed_abs, tag = 'smem constant byte address 0x4 - core index']
  #allocation1 [shape = 'u32[144,128]{1,0:T(1,128)}', space=vmem, size = 0x12000, scoped, tag = 'internal scratch']
  #allocation2 [shape = 'f32[8,32]{1,0:T(8,128)}', space=vmem, size = 0x1000, scoped, tag = 'scratch operand']
  %s0 = inlined_call_operand.vmem [shape: bf16[1024,16], index: 0, kind: input, shape index: {}]
  %s1 = inlined_call_operand.vmem [shape: bf16[16,48], index: 1, kind: input, shape index: {}]
  %s2 = inlined_call_operand.vmem [shape: bf16[16,32], index: 2, kind: input, shape index: {}]
  %s3 = inlined_call_operand.hbm [shape: f32[2,4,32], index: 3, kind: output, shape index: {}]
  %s4 = sld [smem:[#allocation0]]
  $region53: #{tpu_custom_call.1} parent=0
    _
  %s6 = ssub.s32 1, %s4
  %s7 = scalar_select 0, %s6, %s4
  $region1: #{tpu_custom_call.1} parent=0
    #allocation3 [shape = 'u8[4096]{0}', space=vmem, size = 0x1000, scoped, tag = 'output window, operand 0']
    #allocation4 [shape = 's32[2]{0}', space=sflag, size = 0x8, scoped, tag = 'scoped memory for tpu_custom_call.1']
    %8 = vsyncpa [#allocation4], 0
    %s9 = scalar_lea.sflag [#allocation4], 1
    %10 = vsyncpa %s9, 0
    loop: start=0, step=1, limit=4
    $region2: #{tpu_custom_call.1} parent=1 // loop_pre_header
      _
    $region3: #{tpu_custom_call.1} parent=1 // loop_header
      %s12 = sphi 0, %s16
      %p13 = scmp.ge.s32.totalorder %s12, 4
      %s19 = sphi 0, %s31
      %s20 = sphi 0, %s27
      %s21 = sphi 0, %s19
      %s22 = sphi 0, %s20
      %s23 = sphi 0, %s21
      %s24 = sphi 0, %s22
      %s36 = sphi 0, %s38
      %s39 = sphi 0, %s36
      %s40 = sphi 0, %s39
      %s56 = sphi 0, %s40
      %s60 = sphi 0, %s60
      %s62 = sphi 0, %s60
      %s63 = sphi 0, %s62
      %s77 = sphi 0, %s63
      %s81 = sphi 0, %s81
      %s83 = sphi 0, %s81
      %s84 = sphi 0, %s83
      %s98 = sphi 0, %s84
      %s104 = sphi 0, %s106
      %s107 = sphi 0, %s104
      %s108 = sphi 0, %s107
      %s124 = sphi 0, %s108
    $region4: #{tpu_custom_call.1} parent=1 // loop_header_branch
      %15 = sbr.rel (%p13) target = $region8
    $region5: #{tpu_custom_call.1} parent=1 // loop_body
      %s17 = ssub.s32 %s12, 1
      %s18 = ssub.s32 %s12, 2
      %s25 = sadd.s32 1, %s20
      %p26 = scmp.ge.s32.totalorder %s25, 1
      %s27 = scalar_select %p26, 0, %s25
      %s28 = sadd.s32 1, %s19
      %s29 = scalar_select %p26, %s28, %s19
      %p30 = scmp.ge.s32.totalorder %s29, 2
      %s31 = scalar_select %p30, 0, %s29
      %s32 = sadd.s32 %s19, %s20
      %s33 = sadd.s32 %s31, %s27
      %s34 = ssub.s32 %s32, %s33
      %p35 = scmp.eq.s32.totalorder %s34, 0
      %s37 = sadd.s32 %s36, 1
      %s38 = scalar_select %p35, %s36, %s37
      %p41 = pneg %p35
      %p42 = scmp.eq.s32.totalorder %s12, 1
      %p43 = por %p41, %p42
      %p44 = scmp.ne.s32.totalorder %s36, %s39
      %p45 = scmp.eq.s32.totalorder %s12, 0
      %p46 = por %p44, %p45
      %p47 = scmp.ne.s32.totalorder %s36, %s39
      %p48 = scmp.eq.s32.totalorder %s17, 1
      %p49 = por %p47, %p48
      %p50 = scmp.ne.s32.totalorder %s39, %s40
      %p51 = scmp.eq.s32.totalorder %s17, 0
      %p52 = por %p50, %p51
      %p53 = scmp.ne.s32.totalorder %s39, %s40
      %p54 = scmp.eq.s32.totalorder %s18, 1
      %p55 = por %p53, %p54
      %p57 = scmp.ne.s32.totalorder %s40, %s56
      %p58 = scmp.eq.s32.totalorder %s18, 0
      %p59 = por %p57, %p58
      %s61 = sadd.s32 %s60, 1
      %p64 = scmp.eq.s32.totalorder %s12, 1
      %p65 = scmp.ne.s32.totalorder %s60, %s62
      %p66 = scmp.eq.s32.totalorder %s12, 0
      %p67 = por %p65, %p66
      %p68 = scmp.ne.s32.totalorder %s60, %s62
      %p69 = scmp.eq.s32.totalorder %s17, 1
      %p70 = por %p68, %p69
      %p71 = scmp.ne.s32.totalorder %s62, %s63
      %p72 = scmp.eq.s32.totalorder %s17, 0
      %p73 = por %p71, %p72
      %p74 = scmp.ne.s32.totalorder %s62, %s63
      %p75 = scmp.eq.s32.totalorder %s18, 1
      %p76 = por %p74, %p75
      %p78 = scmp.ne.s32.totalorder %s63, %s77
      %p79 = scmp.eq.s32.totalorder %s18, 0
      %p80 = por %p78, %p79
      %s82 = sadd.s32 %s81, 1
      %p85 = scmp.eq.s32.totalorder %s12, 1
      %p86 = scmp.ne.s32.totalorder %s81, %s83
      %p87 = scmp.eq.s32.totalorder %s12, 0
      %p88 = por %p86, %p87
      %p89 = scmp.ne.s32.totalorder %s81, %s83
      %p90 = scmp.eq.s32.totalorder %s17, 1
      %p91 = por %p89, %p90
      %p92 = scmp.ne.s32.totalorder %s83, %s84
      %p93 = scmp.eq.s32.totalorder %s17, 0
      %p94 = por %p92, %p93
      %p95 = scmp.ne.s32.totalorder %s83, %s84
      %p96 = scmp.eq.s32.totalorder %s18, 1
      %p97 = por %p95, %p96
      %p99 = scmp.ne.s32.totalorder %s84, %s98
      %p100 = scmp.eq.s32.totalorder %s18, 0
      %p101 = por %p99, %p100
      %s102 = ssub.s32 %s19, %s31
      %p103 = scmp.eq.s32.totalorder %s102, 0
      %s105 = sadd.s32 %s104, 1
      %s106 = scalar_select %p103, %s104, %s105
      %p109 = pneg %p103
      %p110 = scmp.eq.s32.totalorder %s12, 1
      %p111 = por %p109, %p110
      %p112 = scmp.ne.s32.totalorder %s104, %s107
      %p113 = scmp.eq.s32.totalorder %s12, 0
      %p114 = por %p112, %p113
      %p115 = scmp.ne.s32.totalorder %s104, %s107
      %p116 = scmp.eq.s32.totalorder %s17, 1
      %p117 = por %p115, %p116
      %p118 = scmp.ne.s32.totalorder %s107, %s108
      %p119 = scmp.eq.s32.totalorder %s17, 0
      %p120 = por %p118, %p119
      %p121 = scmp.ne.s32.totalorder %s107, %s108
      %p122 = scmp.eq.s32.totalorder %s18, 1
      %p123 = por %p121, %p122
      %p125 = scmp.ne.s32.totalorder %s108, %s124
      %p126 = scmp.eq.s32.totalorder %s18, 0
      %p127 = por %p125, %p126
      %p128 = scmp.le.s32.totalorder 1, %s12
      %p129 = scmp.lt.s32.totalorder %s12, 3
      %p130 = pnand %p128, %p129
      %p131 = pneg %p130
      // Predicated region
      $region9: #{tpu_custom_call.1} parent=5 // pred_check
        _
      $region10: #{tpu_custom_call.1} parent=5 // pred_check_branch
        %133 = sbr.rel (%p130) target = $region12
      $region11: #{tpu_custom_call.1} parent=5 // pred_region
        %s134 = ssub.s32 %s12, 1
        // Predicated region
        $region13: #{tpu_custom_call.1} parent=11 // pred_check
          %p135 = pneg %p73
        $region14: #{tpu_custom_call.1} parent=11 // pred_check_branch
          %137 = sbr.rel (%p135) target = $region16
        $region15: #{tpu_custom_call.1} parent=11 // pred_region
          _
        $region16: #{tpu_custom_call.1} parent=11 // pred_fallthru
          _
        // Predicated region
        $region17: #{tpu_custom_call.1} parent=11 // pred_check
          %p138 = pneg %p94
        $region18: #{tpu_custom_call.1} parent=11 // pred_check_branch
          %140 = sbr.rel (%p138) target = $region20
        $region19: #{tpu_custom_call.1} parent=11 // pred_region
          _
        $region20: #{tpu_custom_call.1} parent=11 // pred_fallthru
          _
      $region12: #{tpu_custom_call.1} parent=5 // pred_fallthru
        _
      %p141 = scmp.lt.s32.totalorder %s12, 2
      // Predicated region
      $region21: #{tpu_custom_call.1} parent=5 // pred_check
        %p142 = pneg %p141
      $region22: #{tpu_custom_call.1} parent=5 // pred_check_branch
        %144 = sbr.rel (%p142) target = $region24
      $region23: #{tpu_custom_call.1} parent=5 // pred_region
        // Predicated region
        $region25: #{tpu_custom_call.1} parent=23 // pred_check
          %p145 = pneg %p46
        $region26: #{tpu_custom_call.1} parent=23 // pred_check_branch
          %147 = sbr.rel (%p145) target = $region28
        $region27: #{tpu_custom_call.1} parent=23 // pred_region
          %s148 = sadd.s32 %s19, %s20
          %s149 = smul.u32 64, %s148
          %p150 = scmp.lt.s32.totalorder %s149, 127
          %s151 = scalar_select %p150, %s149, 127
          %s152 = smul.addr %s151, 4
          %s153 = scalar_lea.vmem %s0, %s152
          %s154 = sadd.s32 %s19, %s20
          %s155 = smul.u32 64, %s154
        $region28: #{tpu_custom_call.1} parent=23 // pred_fallthru
          _
      $region24: #{tpu_custom_call.1} parent=5 // pred_fallthru
        _
      %p156 = scmp.le.s32.totalorder 1, %s12
      %p157 = scmp.lt.s32.totalorder %s12, 3
      %p158 = pnand %p156, %p157
      %p159 = pneg %p158
      // Predicated region
      $region29: #{tpu_custom_call.1} parent=5 // pred_check
        _
      $region30: #{tpu_custom_call.1} parent=5 // pred_check_branch
        %161 = sbr.rel (%p158) target = $region32
      $region31: #{tpu_custom_call.1} parent=5 // pred_region
        %s162 = ssub.s32 %s12, 1
        %s163 = sadd.s32 %s21, %s22
        %s164 = smul.u32 64, %s163
        %p165 = scmp.lt.s32.totalorder %s164, 127
        %s166 = scalar_select %p165, %s164, 127
        %s167 = smul.addr %s166, 4
        %s168 = scalar_lea.vmem %s0, %s167
        %p169 = pneg %p52
        %p170 = pneg %p49
        %p171 = pneg %p73
        %p172 = pneg %p70
        %p173 = pneg %p94
        %p174 = pneg %p91
        %p175 = pneg %p120
        %p176 = pneg %p117
        %s177 = sand.u32 %s107, 1
        %s178 = scalar_lea.sflag [#allocation4], %s177
        %s179 = sand.u32 %s107, 1
        %s180 = smul.addr %s179, 4
        %s181 = scalar_lea.vmem [#allocation3], %s180
        %s182 = sadd.s32 %s21, %s22
        %s183 = smul.u32 64, %s182
        %p184 = scmp.lt.s32.totalorder %s183, 127
        %s185 = scalar_select %p184, %s183, 127
        %s186 = smul.addr %s185, 4
        %s187 = scalar_lea.vmem %s0, %s186
        %s188 = sadd.s32 %s21, %s22
        %s189 = smul.u32 64, %s188
        %p191 = scmp.eq.s32.totalorder %s22, 0
        // Predicated region
        $region33: #{tpu_custom_call.1} parent=31 // pred_check
          %p192 = pneg %p191
        $region34: #{tpu_custom_call.1} parent=31 // pred_check_branch
          %194 = sbr.rel (%p192) target = $region36
        $region35: #{tpu_custom_call.1} parent=31 // pred_region
          %vm195 = vcmask 261120
          %196 = vst.msk [vmem:[#allocation2] sm:$0xff] %vm195, 0.0
        $region36: #{tpu_custom_call.1} parent=31 // pred_fallthru
          _
        %v197 = vld [vmem:[%s187] sm:$0xf]
        %v198 = vld [vmem:[%s187 + $0x4] sm:$0xf]
        %v199 = vld [vmem:[%s187 + $0x8] sm:$0xf]
        %v200 = vld [vmem:[%s187 + $0xc] sm:$0xf]
        %v201 = vld [vmem:[%s187 + $0x10] sm:$0xf]
        %v202 = vld [vmem:[%s187 + $0x14] sm:$0xf]
        %v203 = vld [vmem:[%s187 + $0x18] sm:$0xf]
        %v204 = vld [vmem:[%s187 + $0x1c] sm:$0xf]
        %v205 = vld [vmem:[%s187 + $0x20] sm:$0xf]
        %v206 = vld [vmem:[%s187 + $0x24] sm:$0xf]
        %v207 = vld [vmem:[%s187 + $0x28] sm:$0xf]
        %v208 = vld [vmem:[%s187 + $0x2c] sm:$0xf]
        %v209 = vld [vmem:[%s187 + $0x30] sm:$0xf]
        %v210 = vld [vmem:[%s187 + $0x34] sm:$0xf]
        %v211 = vld [vmem:[%s187 + $0x38] sm:$0xf]
        %v212 = vld [vmem:[%s187 + $0x3c] sm:$0xf]
        %v213 = vld [vmem:[%s187 + $0x40] sm:$0xf]
        %v214 = vld [vmem:[%s187 + $0x44] sm:$0xf]
        %v215 = vld [vmem:[%s187 + $0x48] sm:$0xf]
        %v216 = vld [vmem:[%s187 + $0x4c] sm:$0xf]
        %v217 = vld [vmem:[%s187 + $0x50] sm:$0xf]
        %v218 = vld [vmem:[%s187 + $0x54] sm:$0xf]
        %v219 = vld [vmem:[%s187 + $0x58] sm:$0xf]
        %v220 = vld [vmem:[%s187 + $0x5c] sm:$0xf]
        %v221 = vld [vmem:[%s187 + $0x60] sm:$0xf]
        %v222 = vld [vmem:[%s187 + $0x64] sm:$0xf]
        %v223 = vld [vmem:[%s187 + $0x68] sm:$0xf]
        %v224 = vld [vmem:[%s187 + $0x6c] sm:$0xf]
        %v225 = vld [vmem:[%s187 + $0x70] sm:$0xf]
        %v226 = vld [vmem:[%s187 + $0x74] sm:$0xf]
        %v227 = vld [vmem:[%s187 + $0x78] sm:$0xf]
        %v228 = vld [vmem:[%s187 + $0x7c] sm:$0xf]
        %v229 = vld [vmem:[%s187 + $0x80] sm:$0xf]
        %v230 = vld [vmem:[%s187 + $0x84] sm:$0xf]
        %v231 = vld [vmem:[%s187 + $0x88] sm:$0xf]
        %v232 = vld [vmem:[%s187 + $0x8c] sm:$0xf]
        %v233 = vld [vmem:[%s187 + $0x90] sm:$0xf]
        %v234 = vld [vmem:[%s187 + $0x94] sm:$0xf]
        %v235 = vld [vmem:[%s187 + $0x98] sm:$0xf]
        %v236 = vld [vmem:[%s187 + $0x9c] sm:$0xf]
        %v237 = vld [vmem:[%s187 + $0xa0] sm:$0xf]
        %v238 = vld [vmem:[%s187 + $0xa4] sm:$0xf]
        %v239 = vld [vmem:[%s187 + $0xa8] sm:$0xf]
        %v240 = vld [vmem:[%s187 + $0xac] sm:$0xf]
        %v241 = vld [vmem:[%s187 + $0xb0] sm:$0xf]
        %v242 = vld [vmem:[%s187 + $0xb4] sm:$0xf]
        %v243 = vld [vmem:[%s187 + $0xb8] sm:$0xf]
        %v244 = vld [vmem:[%s187 + $0xbc] sm:$0xf]
        %v245 = vld [vmem:[%s187 + $0xc0] sm:$0xf]
        %v246 = vld [vmem:[%s187 + $0xc4] sm:$0xf]
        %v247 = vld [vmem:[%s187 + $0xc8] sm:$0xf]
        %v248 = vld [vmem:[%s187 + $0xcc] sm:$0xf]
        %v249 = vld [vmem:[%s187 + $0xd0] sm:$0xf]
        %v250 = vld [vmem:[%s187 + $0xd4] sm:$0xf]
        %v251 = vld [vmem:[%s187 + $0xd8] sm:$0xf]
        %v252 = vld [vmem:[%s187 + $0xdc] sm:$0xf]
        %v253 = vld [vmem:[%s187 + $0xe0] sm:$0xf]
        %v254 = vld [vmem:[%s187 + $0xe4] sm:$0xf]
        %v255 = vld [vmem:[%s187 + $0xe8] sm:$0xf]
        %v256 = vld [vmem:[%s187 + $0xec] sm:$0xf]
        %v257 = vld [vmem:[%s187 + $0xf0] sm:$0xf]
        %v258 = vld [vmem:[%s187 + $0xf4] sm:$0xf]
        %v259 = vld [vmem:[%s187 + $0xf8] sm:$0xf]
        %v260 = vld [vmem:[%s187 + $0xfc] sm:$0xf]
        %v261 = vld [vmem:[%s1] sm:$0xf]
        %v262 = vld [vmem:[%s1 + $0x4] sm:$0xf]
        %v327 = vunpack.c.l.b16 %v197
        %v328 = vunpack.c.l.b16 %v198
        %v329 = vunpack.c.l.b16 %v199
        %v330 = vunpack.c.l.b16 %v200
        %v331 = vunpack.c.l.b16 %v201
        %v332 = vunpack.c.l.b16 %v202
        %v333 = vunpack.c.l.b16 %v203
        %v334 = vunpack.c.l.b16 %v204
        %v335 = vunpack.c.l.b16 %v205
        %v336 = vunpack.c.l.b16 %v206
        %v337 = vunpack.c.l.b16 %v207
        %v338 = vunpack.c.l.b16 %v208
        %v339 = vunpack.c.l.b16 %v209
        %v340 = vunpack.c.l.b16 %v210
        %v341 = vunpack.c.l.b16 %v211
        %v342 = vunpack.c.l.b16 %v212
        %v343 = vunpack.c.l.b16 %v213
        %v344 = vunpack.c.l.b16 %v214
        %v345 = vunpack.c.l.b16 %v215
        %v346 = vunpack.c.l.b16 %v216
        %v347 = vunpack.c.l.b16 %v217
        %v348 = vunpack.c.l.b16 %v218
        %v349 = vunpack.c.l.b16 %v219
        %v350 = vunpack.c.l.b16 %v220
        %v351 = vunpack.c.l.b16 %v221
        %v352 = vunpack.c.l.b16 %v222
        %v353 = vunpack.c.l.b16 %v223
        %v354 = vunpack.c.l.b16 %v224
        %v355 = vunpack.c.l.b16 %v225
        %v356 = vunpack.c.l.b16 %v226
        %v357 = vunpack.c.l.b16 %v227
        %v358 = vunpack.c.l.b16 %v228
        %v359 = vunpack.c.l.b16 %v229
        %v360 = vunpack.c.l.b16 %v230
        %v361 = vunpack.c.l.b16 %v231
        %v362 = vunpack.c.l.b16 %v232
        %v363 = vunpack.c.l.b16 %v233
        %v364 = vunpack.c.l.b16 %v234
        %v365 = vunpack.c.l.b16 %v235
        %v366 = vunpack.c.l.b16 %v236
        %v367 = vunpack.c.l.b16 %v237
        %v368 = vunpack.c.l.b16 %v238
        %v369 = vunpack.c.l.b16 %v239
        %v370 = vunpack.c.l.b16 %v240
        %v371 = vunpack.c.l.b16 %v241
        %v372 = vunpack.c.l.b16 %v242
        %v373 = vunpack.c.l.b16 %v243
        %v374 = vunpack.c.l.b16 %v244
        %v375 = vunpack.c.l.b16 %v245
        %v376 = vunpack.c.l.b16 %v246
        %v377 = vunpack.c.l.b16 %v247
        %v378 = vunpack.c.l.b16 %v248
        %v379 = vunpack.c.l.b16 %v249
        %v380 = vunpack.c.l.b16 %v250
        %v381 = vunpack.c.l.b16 %v251
        %v382 = vunpack.c.l.b16 %v252
        %v383 = vunpack.c.l.b16 %v253
        %v384 = vunpack.c.l.b16 %v254
        %v385 = vunpack.c.l.b16 %v255
        %v386 = vunpack.c.l.b16 %v256
        %v387 = vunpack.c.l.b16 %v257
        %v388 = vunpack.c.l.b16 %v258
        %v389 = vunpack.c.l.b16 %v259
        %v390 = vunpack.c.l.b16 %v260
        %v391 = vpack.c.b16 %v328, %v327
        %v392 = vpack.c.b16 %v330, %v329
        %v393 = vpack.c.b16 %v332, %v331
        %v394 = vpack.c.b16 %v334, %v333
        %v395 = vpack.c.b16 %v336, %v335
        %v396 = vpack.c.b16 %v338, %v337
        %v397 = vpack.c.b16 %v340, %v339
        %v398 = vpack.c.b16 %v342, %v341
        %v399 = vpack.c.b16 %v344, %v343
        %v400 = vpack.c.b16 %v346, %v345
        %v401 = vpack.c.b16 %v348, %v347
        %v402 = vpack.c.b16 %v350, %v349
        %v403 = vpack.c.b16 %v352, %v351
        %v404 = vpack.c.b16 %v354, %v353
        %v405 = vpack.c.b16 %v356, %v355
        %v406 = vpack.c.b16 %v358, %v357
        %v407 = vpack.c.b16 %v360, %v359
        %v408 = vpack.c.b16 %v362, %v361
        %v409 = vpack.c.b16 %v364, %v363
        %v410 = vpack.c.b16 %v366, %v365
        %v411 = vpack.c.b16 %v368, %v367
        %v412 = vpack.c.b16 %v370, %v369
        %v413 = vpack.c.b16 %v372, %v371
        %v414 = vpack.c.b16 %v374, %v373
        %v415 = vpack.c.b16 %v376, %v375
        %v416 = vpack.c.b16 %v378, %v377
        %v417 = vpack.c.b16 %v380, %v379
        %v418 = vpack.c.b16 %v382, %v381
        %v419 = vpack.c.b16 %v384, %v383
        %v420 = vpack.c.b16 %v386, %v385
        %v421 = vpack.c.b16 %v388, %v387
        %v422 = vpack.c.b16 %v390, %v389
        %v425 = vunpack.c.l.b16 %v261
        %v426 = vunpack.c.l.b16 %v262
        %v427 = vpack.c.b16 %v426, %v425
        %vm429 = vcmask 130048
        %v431 = vsel %vm429, %v391, 0
        %v434 = vsel %vm429, %v392, 0
        %v437 = vsel %vm429, %v393, 0
        %v440 = vsel %vm429, %v394, 0
        %v443 = vsel %vm429, %v395, 0
        %v446 = vsel %vm429, %v396, 0
        %v449 = vsel %vm429, %v397, 0
        %v452 = vsel %vm429, %v398, 0
        %v455 = vsel %vm429, %v399, 0
        %v458 = vsel %vm429, %v400, 0
        %v461 = vsel %vm429, %v401, 0
        %v464 = vsel %vm429, %v402, 0
        %v467 = vsel %vm429, %v403, 0
        %v470 = vsel %vm429, %v404, 0
        %v473 = vsel %vm429, %v405, 0
        %v476 = vsel %vm429, %v406, 0
        %v479 = vsel %vm429, %v407, 0
        %v482 = vsel %vm429, %v408, 0
        %v485 = vsel %vm429, %v409, 0
        %v488 = vsel %vm429, %v410, 0
        %v491 = vsel %vm429, %v411, 0
        %v494 = vsel %vm429, %v412, 0
        %v497 = vsel %vm429, %v413, 0
        %v500 = vsel %vm429, %v414, 0
        %v503 = vsel %vm429, %v415, 0
        %v506 = vsel %vm429, %v416, 0
        %v509 = vsel %vm429, %v417, 0
        %v512 = vsel %vm429, %v418, 0
        %v515 = vsel %vm429, %v419, 0
        %v518 = vsel %vm429, %v420, 0
        %v521 = vsel %vm429, %v421, 0
        %v524 = vsel %vm429, %v422, 0
        %526 = vmatprep.subr.bf16.mxu0 0
        %527 = vmatpush1.bf16.msra.mxu0 %v427
        %528 = vmatprep.subr.bf16.mxu0 0
        %529 = vmatpush1.bf16.msra.mxu0 0
        %530 = vmatprep.subr.bf16.mxu0 0
        %531 = vmatpush1.bf16.msra.mxu0 0
        %532 = vmatprep.subr.bf16.mxu0 0
        %533 = vmatpush1.bf16.msra.mxu0 0
        %534 = vmatprep.subr.bf16.mxu0 0
        %535 = vmatpush1.bf16.msra.mxu0 0
        %536 = vmatprep.subr.bf16.mxu0 0
        %537 = vmatpush1.bf16.msra.mxu0 0
        %538 = vmatprep.subr.bf16.mxu0 0
        %539 = vmatpush1.bf16.msra.mxu0 0
        %540 = vmatprep.subr.bf16.mxu0 0
        %541 = vmatpush1.bf16.msra.mxu0 0
        %542 = vmatprep.subr.bf16.mxu0 0
        %543 = vmatpush1.bf16.msra.mxu0 0
        %544 = vmatprep.subr.bf16.mxu0 0
        %545 = vmatpush1.bf16.msra.mxu0 0
        %546 = vmatprep.subr.bf16.mxu0 0
        %547 = vmatpush1.bf16.msra.mxu0 0
        %548 = vmatprep.subr.bf16.mxu0 0
        %549 = vmatpush1.bf16.msra.mxu0 0
        %550 = vmatprep.subr.bf16.mxu0 0
        %551 = vmatpush1.bf16.msra.mxu0 0
        %552 = vmatprep.subr.bf16.mxu0 0
        %553 = vmatpush1.bf16.msra.mxu0 0
        %554 = vmatprep.subr.bf16.mxu0 0
        %555 = vmatpush1.bf16.msra.mxu0 0
        %556 = vmatprep.subr.bf16.mxu0 0
        %557 = vmatpush1.bf16.msra.mxu0 0
        %558 = vmatprep.mubr.bf16.mxu0 0
        %559 = vmatmul.mubr.bf16.gmra.mrb[0].mxu0 %v431
        %v560 = vpop.f32.mrb[0].mxu0
        %v561 = vadd.f32 0.0, %v560
        %v562 = vpop.f32.mrb[0].mxu0
        %v563 = vpop.f32.mrb[0].mxu0
        %v564 = vadd.f32 0.0, %v563
        %v565 = vpop.f32.mrb[0].mxu0
        %566 = vmatprep.mubr.bf16.mxu0 0
        %567 = vmatmul.mubr.bf16.gmra.mrb[0].mxu0 %v434
        %v568 = vpop.f32.mrb[0].mxu0
        %v569 = vadd.f32 0.0, %v568
        %v570 = vpop.f32.mrb[0].mxu0
        %v571 = vpop.f32.mrb[0].mxu0
        %v572 = vadd.f32 0.0, %v571
        %v573 = vpop.f32.mrb[0].mxu0
        %574 = vmatprep.mubr.bf16.mxu0 0
        %575 = vmatmul.mubr.bf16.gmra.mrb[0].mxu0 %v437
        %v576 = vpop.f32.mrb[0].mxu0
        %v577 = vadd.f32 0.0, %v576
        %v578 = vpop.f32.mrb[0].mxu0
        %v579 = vpop.f32.mrb[0].mxu0
        %v580 = vadd.f32 0.0, %v579
        %v581 = vpop.f32.mrb[0].mxu0
        %582 = vmatprep.mubr.bf16.mxu0 0
        %583 = vmatmul.mubr.bf16.gmra.mrb[0].mxu0 %v440
        %v584 = vpop.f32.mrb[0].mxu0
        %v585 = vadd.f32 0.0, %v584
        %v586 = vpop.f32.mrb[0].mxu0
        %v587 = vpop.f32.mrb[0].mxu0
        %v588 = vadd.f32 0.0, %v587
        %v589 = vpop.f32.mrb[0].mxu0
        %590 = vmatprep.mubr.bf16.mxu0 0
        %591 = vmatmul.mubr.bf16.gmra.mrb[0].mxu0 %v443
        %v592 = vpop.f32.mrb[0].mxu0
        %v593 = vadd.f32 0.0, %v592
        %v594 = vpop.f32.mrb[0].mxu0
        %v595 = vpop.f32.mrb[0].mxu0
        %v596 = vadd.f32 0.0, %v595
        %v597 = vpop.f32.mrb[0].mxu0
        %598 = vmatprep.mubr.bf16.mxu0 0
        %599 = vmatmul.mubr.bf16.gmra.mrb[0].mxu0 %v446
        %v600 = vpop.f32.mrb[0].mxu0
        %v601 = vadd.f32 0.0, %v600
        %v602 = vpop.f32.mrb[0].mxu0
        %v603 = vpop.f32.mrb[0].mxu0
        %v604 = vadd.f32 0.0, %v603
        %v605 = vpop.f32.mrb[0].mxu0
        %606 = vmatprep.mubr.bf16.mxu0 0
        %607 = vmatmul.mubr.bf16.gmra.mrb[0].mxu0 %v449
        %v608 = vpop.f32.mrb[0].mxu0
        %v609 = vadd.f32 0.0, %v608
        %v610 = vpop.f32.mrb[0].mxu0
        %v611 = vpop.f32.mrb[0].mxu0
        %v612 = vadd.f32 0.0, %v611
        %v613 = vpop.f32.mrb[0].mxu0
        %614 = vmatprep.mubr.bf16.mxu0 0
        %615 = vmatmul.mubr.bf16.gmra.mrb[0].mxu0 %v452
        %v616 = vpop.f32.mrb[0].mxu0
        %v617 = vadd.f32 0.0, %v616
        %v618 = vpop.f32.mrb[0].mxu0
        %v619 = vpop.f32.mrb[0].mxu0
        %v620 = vadd.f32 0.0, %v619
        %v621 = vpop.f32.mrb[0].mxu0
        %622 = vmatprep.mubr.bf16.mxu0 0
        %623 = vmatmul.mubr.bf16.gmra.mrb[0].mxu0 %v455
        %v624 = vpop.f32.mrb[0].mxu0
        %v625 = vadd.f32 0.0, %v624
        %v626 = vpop.f32.mrb[0].mxu0
        %v627 = vpop.f32.mrb[0].mxu0
        %v628 = vadd.f32 0.0, %v627
        %v629 = vpop.f32.mrb[0].mxu0
        %630 = vmatprep.mubr.bf16.mxu0 0
        %631 = vmatmul.mubr.bf16.gmra.mrb[0].mxu0 %v458
        %v632 = vpop.f32.mrb[0].mxu0
        %v633 = vadd.f32 0.0, %v632
        %v634 = vpop.f32.mrb[0].mxu0
        %v635 = vpop.f32.mrb[0].mxu0
        %v636 = vadd.f32 0.0, %v635
        %v637 = vpop.f32.mrb[0].mxu0
        %638 = vmatprep.mubr.bf16.mxu0 0
        %639 = vmatmul.mubr.bf16.gmra.mrb[0].mxu0 %v461
        %v640 = vpop.f32.mrb[0].mxu0
        %v641 = vadd.f32 0.0, %v640
        %v642 = vpop.f32.mrb[0].mxu0
        %v643 = vpop.f32.mrb[0].mxu0
        %v644 = vadd.f32 0.0, %v643
        %v645 = vpop.f32.mrb[0].mxu0
        %646 = vmatprep.mubr.bf16.mxu0 0
        %647 = vmatmul.mubr.bf16.gmra.mrb[0].mxu0 %v464
        %v648 = vpop.f32.mrb[0].mxu0
        %v649 = vadd.f32 0.0, %v648
        %v650 = vpop.f32.mrb[0].mxu0
        %v651 = vpop.f32.mrb[0].mxu0
        %v652 = vadd.f32 0.0, %v651
        %v653 = vpop.f32.mrb[0].mxu0
        %654 = vmatprep.mubr.bf16.mxu0 0
        %655 = vmatmul.mubr.bf16.gmra.mrb[0].mxu0 %v467
        %v656 = vpop.f32.mrb[0].mxu0
        %v657 = vadd.f32 0.0, %v656
        %v658 = vpop.f32.mrb[0].mxu0
        %v659 = vpop.f32.mrb[0].mxu0
        %v660 = vadd.f32 0.0, %v659
        %v661 = vpop.f32.mrb[0].mxu0
        %662 = vmatprep.mubr.bf16.mxu0 0
        %663 = vmatmul.mubr.bf16.gmra.mrb[0].mxu0 %v470
        %v664 = vpop.f32.mrb[0].mxu0
        %v665 = vadd.f32 0.0, %v664
        %v666 = vpop.f32.mrb[0].mxu0
        %v667 = vpop.f32.mrb[0].mxu0
        %v668 = vadd.f32 0.0, %v667
        %v669 = vpop.f32.mrb[0].mxu0
        %670 = vmatprep.mubr.bf16.mxu0 0
        %671 = vmatmul.mubr.bf16.gmra.mrb[0].mxu0 %v473
        %v672 = vpop.f32.mrb[0].mxu0
        %v673 = vadd.f32 0.0, %v672
        %v674 = vpop.f32.mrb[0].mxu0
        %v675 = vpop.f32.mrb[0].mxu0
        %v676 = vadd.f32 0.0, %v675
        %v677 = vpop.f32.mrb[0].mxu0
        %678 = vmatprep.mubr.bf16.mxu0 0
        %679 = vmatmul.mubr.bf16.gmra.mrb[0].mxu0 %v476
        %v680 = vpop.f32.mrb[0].mxu0
        %v681 = vadd.f32 0.0, %v680
        %v682 = vpop.f32.mrb[0].mxu0
        %v683 = vpop.f32.mrb[0].mxu0
        %v684 = vadd.f32 0.0, %v683
        %v685 = vpop.f32.mrb[0].mxu0
        %686 = vmatprep.mubr.bf16.mxu0 0
        %687 = vmatmul.mubr.bf16.gmra.mrb[0].mxu0 %v479
        %v688 = vpop.f32.mrb[0].mxu0
        %v689 = vadd.f32 0.0, %v688
        %v690 = vpop.f32.mrb[0].mxu0
        %v691 = vpop.f32.mrb[0].mxu0
        %v692 = vadd.f32 0.0, %v691
        %v693 = vpop.f32.mrb[0].mxu0
        %694 = vmatprep.mubr.bf16.mxu0 0
        %695 = vmatmul.mubr.bf16.gmra.mrb[0].mxu0 %v482
        %v696 = vpop.f32.mrb[0].mxu0
        %v697 = vadd.f32 0.0, %v696
        %v698 = vpop.f32.mrb[0].mxu0
        %v699 = vpop.f32.mrb[0].mxu0
        %v700 = vadd.f32 0.0, %v699
        %v701 = vpop.f32.mrb[0].mxu0
        %702 = vmatprep.mubr.bf16.mxu0 0
        %703 = vmatmul.mubr.bf16.gmra.mrb[0].mxu0 %v485
        %v704 = vpop.f32.mrb[0].mxu0
        %v705 = vadd.f32 0.0, %v704
        %v706 = vpop.f32.mrb[0].mxu0
        %v707 = vpop.f32.mrb[0].mxu0
        %v708 = vadd.f32 0.0, %v707
        %v709 = vpop.f32.mrb[0].mxu0
        %710 = vmatprep.mubr.bf16.mxu0 0
        %711 = vmatmul.mubr.bf16.gmra.mrb[0].mxu0 %v488
        %v712 = vpop.f32.mrb[0].mxu0
        %v713 = vadd.f32 0.0, %v712
        %v714 = vpop.f32.mrb[0].mxu0
        %v715 = vpop.f32.mrb[0].mxu0
        %v716 = vadd.f32 0.0, %v715
        %v717 = vpop.f32.mrb[0].mxu0
        %718 = vmatprep.mubr.bf16.mxu0 0
        %719 = vmatmul.mubr.bf16.gmra.mrb[0].mxu0 %v491
        %v720 = vpop.f32.mrb[0].mxu0
        %v721 = vadd.f32 0.0, %v720
        %v722 = vpop.f32.mrb[0].mxu0
        %v723 = vpop.f32.mrb[0].mxu0
        %v724 = vadd.f32 0.0, %v723
        %v725 = vpop.f32.mrb[0].mxu0
        %726 = vmatprep.mubr.bf16.mxu0 0
        %727 = vmatmul.mubr.bf16.gmra.mrb[0].mxu0 %v494
        %v728 = vpop.f32.mrb[0].mxu0
        %v729 = vadd.f32 0.0, %v728
        %v730 = vpop.f32.mrb[0].mxu0
        %v731 = vpop.f32.mrb[0].mxu0
        %v732 = vadd.f32 0.0, %v731
        %v733 = vpop.f32.mrb[0].mxu0
        %734 = vmatprep.mubr.bf16.mxu0 0
        %735 = vmatmul.mubr.bf16.gmra.mrb[0].mxu0 %v497
        %v736 = vpop.f32.mrb[0].mxu0
        %v737 = vadd.f32 0.0, %v736
        %v738 = vpop.f32.mrb[0].mxu0
        %v739 = vpop.f32.mrb[0].mxu0
        %v740 = vadd.f32 0.0, %v739
        %v741 = vpop.f32.mrb[0].mxu0
        %742 = vmatprep.mubr.bf16.mxu0 0
        %743 = vmatmul.mubr.bf16.gmra.mrb[0].mxu0 %v500
        %v744 = vpop.f32.mrb[0].mxu0
        %v745 = vadd.f32 0.0, %v744
        %v746 = vpop.f32.mrb[0].mxu0
        %v747 = vpop.f32.mrb[0].mxu0
        %v748 = vadd.f32 0.0, %v747
        %v749 = vpop.f32.mrb[0].mxu0
        %750 = vmatprep.mubr.bf16.mxu0 0
        %751 = vmatmul.mubr.bf16.gmra.mrb[0].mxu0 %v503
        %v752 = vpop.f32.mrb[0].mxu0
        %v753 = vadd.f32 0.0, %v752
        %v754 = vpop.f32.mrb[0].mxu0
        %v755 = vpop.f32.mrb[0].mxu0
        %v756 = vadd.f32 0.0, %v755
        %v757 = vpop.f32.mrb[0].mxu0
        %758 = vmatprep.mubr.bf16.mxu0 0
        %759 = vmatmul.mubr.bf16.gmra.mrb[0].mxu0 %v506
        %v760 = vpop.f32.mrb[0].mxu0
        %v761 = vadd.f32 0.0, %v760
        %v762 = vpop.f32.mrb[0].mxu0
        %v763 = vpop.f32.mrb[0].mxu0
        %v764 = vadd.f32 0.0, %v763
        %v765 = vpop.f32.mrb[0].mxu0
        %766 = vmatprep.mubr.bf16.mxu0 0
        %767 = vmatmul.mubr.bf16.gmra.mrb[0].mxu0 %v509
        %v768 = vpop.f32.mrb[0].mxu0
        %v769 = vadd.f32 0.0, %v768
        %v770 = vpop.f32.mrb[0].mxu0
        %v771 = vpop.f32.mrb[0].mxu0
        %v772 = vadd.f32 0.0, %v771
        %v773 = vpop.f32.mrb[0].mxu0
        %774 = vmatprep.mubr.bf16.mxu0 0
        %775 = vmatmul.mubr.bf16.gmra.mrb[0].mxu0 %v512
        %v776 = vpop.f32.mrb[0].mxu0
        %v777 = vadd.f32 0.0, %v776
        %v778 = vpop.f32.mrb[0].mxu0
        %v779 = vpop.f32.mrb[0].mxu0
        %v780 = vadd.f32 0.0, %v779
        %v781 = vpop.f32.mrb[0].mxu0
        %782 = vmatprep.mubr.bf16.mxu0 0
        %783 = vmatmul.mubr.bf16.gmra.mrb[0].mxu0 %v515
        %v784 = vpop.f32.mrb[0].mxu0
        %v785 = vadd.f32 0.0, %v784
        %v786 = vpop.f32.mrb[0].mxu0
        %v787 = vpop.f32.mrb[0].mxu0
        %v788 = vadd.f32 0.0, %v787
        %v789 = vpop.f32.mrb[0].mxu0
        %790 = vmatprep.mubr.bf16.mxu0 0
        %791 = vmatmul.mubr.bf16.gmra.mrb[0].mxu0 %v518
        %v792 = vpop.f32.mrb[0].mxu0
        %v793 = vadd.f32 0.0, %v792
        %v794 = vpop.f32.mrb[0].mxu0
        %v795 = vpop.f32.mrb[0].mxu0
        %v796 = vadd.f32 0.0, %v795
        %v797 = vpop.f32.mrb[0].mxu0
        %798 = vmatprep.mubr.bf16.mxu0 0
        %799 = vmatmul.mubr.bf16.gmra.mrb[0].mxu0 %v521
        %v800 = vpop.f32.mrb[0].mxu0
        %v801 = vadd.f32 0.0, %v800
        %v802 = vpop.f32.mrb[0].mxu0
        %v803 = vpop.f32.mrb[0].mxu0
        %v804 = vadd.f32 0.0, %v803
        %v805 = vpop.f32.mrb[0].mxu0
        %806 = vmatprep.mubr.bf16.mxu0 0
        %807 = vmatmul.mubr.bf16.gmra.mrb[0].mxu0 %v524
        %v808 = vpop.f32.mrb[0].mxu0
        %v809 = vadd.f32 0.0, %v808
        %v810 = vpop.f32.mrb[0].mxu0
        %v811 = vpop.f32.mrb[0].mxu0
        %v812 = vadd.f32 0.0, %v811
        %v813 = vpop.f32.mrb[0].mxu0
        %814 = vdwg.mxu0
        %v815 = vmax.f32 %v561, 0.0
        %v816 = vmax.f32 %v564, 0.0
        %v817 = vmax.f32 %v569, 0.0
        %v818 = vmax.f32 %v572, 0.0
        %v819 = vmax.f32 %v577, 0.0
        %v820 = vmax.f32 %v580, 0.0
        %v821 = vmax.f32 %v585, 0.0
        %v822 = vmax.f32 %v588, 0.0
        %v823 = vmax.f32 %v593, 0.0
        %v824 = vmax.f32 %v596, 0.0
        %v825 = vmax.f32 %v601, 0.0
        %v826 = vmax.f32 %v604, 0.0
        %v827 = vmax.f32 %v609, 0.0
        %v828 = vmax.f32 %v612, 0.0
        %v829 = vmax.f32 %v617, 0.0
        %v830 = vmax.f32 %v620, 0.0
        %v831 = vmax.f32 %v625, 0.0
        %v832 = vmax.f32 %v628, 0.0
        %v833 = vmax.f32 %v633, 0.0
        %v834 = vmax.f32 %v636, 0.0
        %v835 = vmax.f32 %v641, 0.0
        %v836 = vmax.f32 %v644, 0.0
        %v837 = vmax.f32 %v649, 0.0
        %v838 = vmax.f32 %v652, 0.0
        %v839 = vmax.f32 %v657, 0.0
        %v840 = vmax.f32 %v660, 0.0
        %v841 = vmax.f32 %v665, 0.0
        %v842 = vmax.f32 %v668, 0.0
        %v843 = vmax.f32 %v673, 0.0
        %v844 = vmax.f32 %v676, 0.0
        %v845 = vmax.f32 %v681, 0.0
        %v846 = vmax.f32 %v684, 0.0
        %v847 = vmax.f32 %v689, 0.0
        %v848 = vmax.f32 %v692, 0.0
        %v849 = vmax.f32 %v697, 0.0
        %v850 = vmax.f32 %v700, 0.0
        %v851 = vmax.f32 %v705, 0.0
        %v852 = vmax.f32 %v708, 0.0
        %v853 = vmax.f32 %v713, 0.0
        %v854 = vmax.f32 %v716, 0.0
        %v855 = vmax.f32 %v721, 0.0
        %v856 = vmax.f32 %v724, 0.0
        %v857 = vmax.f32 %v729, 0.0
        %v858 = vmax.f32 %v732, 0.0
        %v859 = vmax.f32 %v737, 0.0
        %v860 = vmax.f32 %v740, 0.0
        %v861 = vmax.f32 %v745, 0.0
        %v862 = vmax.f32 %v748, 0.0
        %v863 = vmax.f32 %v753, 0.0
        %v864 = vmax.f32 %v756, 0.0
        %v865 = vmax.f32 %v761, 0.0
        %v866 = vmax.f32 %v764, 0.0
        %v867 = vmax.f32 %v769, 0.0
        %v868 = vmax.f32 %v772, 0.0
        %v869 = vmax.f32 %v777, 0.0
        %v870 = vmax.f32 %v780, 0.0
        %v871 = vmax.f32 %v785, 0.0
        %v872 = vmax.f32 %v788, 0.0
        %v873 = vmax.f32 %v793, 0.0
        %v874 = vmax.f32 %v796, 0.0
        %v875 = vmax.f32 %v801, 0.0
        %v876 = vmax.f32 %v804, 0.0
        %v877 = vmax.f32 %v809, 0.0
        %v878 = vmax.f32 %v812, 0.0
        %v879 = vpack.c.bf16 %v816, %v815
        %v880 = vpack.c.bf16 %v818, %v817
        %v881 = vpack.c.bf16 %v820, %v819
        %v882 = vpack.c.bf16 %v822, %v821
        %v883 = vpack.c.bf16 %v824, %v823
        %v884 = vpack.c.bf16 %v826, %v825
        %v885 = vpack.c.bf16 %v828, %v827
        %v886 = vpack.c.bf16 %v830, %v829
        %v887 = vpack.c.bf16 %v832, %v831
        %v888 = vpack.c.bf16 %v834, %v833
        %v889 = vpack.c.bf16 %v836, %v835
        %v890 = vpack.c.bf16 %v838, %v837
        %v891 = vpack.c.bf16 %v840, %v839
        %v892 = vpack.c.bf16 %v842, %v841
        %v893 = vpack.c.bf16 %v844, %v843
        %v894 = vpack.c.bf16 %v846, %v845
        %v895 = vpack.c.bf16 %v848, %v847
        %v896 = vpack.c.bf16 %v850, %v849
        %v897 = vpack.c.bf16 %v852, %v851
        %v898 = vpack.c.bf16 %v854, %v853
        %v899 = vpack.c.bf16 %v856, %v855
        %v900 = vpack.c.bf16 %v858, %v857
        %v901 = vpack.c.bf16 %v860, %v859
        %v902 = vpack.c.bf16 %v862, %v861
        %v903 = vpack.c.bf16 %v864, %v863
        %v904 = vpack.c.bf16 %v866, %v865
        %v905 = vpack.c.bf16 %v868, %v867
        %v906 = vpack.c.bf16 %v870, %v869
        %v907 = vpack.c.bf16 %v872, %v871
        %v908 = vpack.c.bf16 %v874, %v873
        %v909 = vpack.c.bf16 %v876, %v875
        %v910 = vpack.c.bf16 %v878, %v877
        %v911 = vld [vmem:[%s2] sm:$0xf]
        %v912 = vld [vmem:[%s2 + $0x4] sm:$0xf]
        %945 = vrot.lane.b32.xlu0 %v879, 96
        %v946 = vpop.permute.xlu0 %945
        %947 = vrot.lane.b32.xlu0 %v880, 96
        %v948 = vpop.permute.xlu0 %947
        %949 = vrot.lane.b32.xlu0 %v881, 96
        %v950 = vpop.permute.xlu0 %949
        %951 = vrot.lane.b32.xlu0 %v882, 96
        %v952 = vpop.permute.xlu0 %951
        %953 = vrot.lane.b32.xlu0 %v883, 96
        %v954 = vpop.permute.xlu0 %953
        %955 = vrot.lane.b32.xlu0 %v884, 96
        %v956 = vpop.permute.xlu0 %955
        %957 = vrot.lane.b32.xlu0 %v885, 96
        %v958 = vpop.permute.xlu0 %957
        %959 = vrot.lane.b32.xlu0 %v886, 96
        %v960 = vpop.permute.xlu0 %959
        %961 = vrot.lane.b32.xlu0 %v887, 96
        %v962 = vpop.permute.xlu0 %961
        %963 = vrot.lane.b32.xlu0 %v888, 96
        %v964 = vpop.permute.xlu0 %963
        %965 = vrot.lane.b32.xlu0 %v889, 96
        %v966 = vpop.permute.xlu0 %965
        %967 = vrot.lane.b32.xlu0 %v890, 96
        %v968 = vpop.permute.xlu0 %967
        %969 = vrot.lane.b32.xlu0 %v891, 96
        %v970 = vpop.permute.xlu0 %969
        %971 = vrot.lane.b32.xlu0 %v892, 96
        %v972 = vpop.permute.xlu0 %971
        %973 = vrot.lane.b32.xlu0 %v893, 96
        %v974 = vpop.permute.xlu0 %973
        %975 = vrot.lane.b32.xlu0 %v894, 96
        %v976 = vpop.permute.xlu0 %975
        %977 = vrot.lane.b32.xlu0 %v895, 96
        %v978 = vpop.permute.xlu0 %977
        %979 = vrot.lane.b32.xlu0 %v896, 96
        %v980 = vpop.permute.xlu0 %979
        %981 = vrot.lane.b32.xlu0 %v897, 96
        %v982 = vpop.permute.xlu0 %981
        %983 = vrot.lane.b32.xlu0 %v898, 96
        %v984 = vpop.permute.xlu0 %983
        %985 = vrot.lane.b32.xlu0 %v899, 96
        %v986 = vpop.permute.xlu0 %985
        %987 = vrot.lane.b32.xlu0 %v900, 96
        %v988 = vpop.permute.xlu0 %987
        %989 = vrot.lane.b32.xlu0 %v901, 96
        %v990 = vpop.permute.xlu0 %989
        %991 = vrot.lane.b32.xlu0 %v902, 96
        %v992 = vpop.permute.xlu0 %991
        %993 = vrot.lane.b32.xlu0 %v903, 96
        %v994 = vpop.permute.xlu0 %993
        %995 = vrot.lane.b32.xlu0 %v904, 96
        %v996 = vpop.permute.xlu0 %995
        %997 = vrot.lane.b32.xlu0 %v905, 96
        %v998 = vpop.permute.xlu0 %997
        %999 = vrot.lane.b32.xlu0 %v906, 96
        %v1000 = vpop.permute.xlu0 %999
        %1001 = vrot.lane.b32.xlu0 %v907, 96
        %v1002 = vpop.permute.xlu0 %1001
        %1003 = vrot.lane.b32.xlu0 %v908, 96
        %v1004 = vpop.permute.xlu0 %1003
        %1005 = vrot.lane.b32.xlu0 %v909, 96
        %v1006 = vpop.permute.xlu0 %1005
        %1007 = vrot.lane.b32.xlu0 %v910, 96
        %v1008 = vpop.permute.xlu0 %1007
        %v1011 = vunpack.c.l.b16 %v911
        %v1012 = vunpack.c.l.b16 %v912
        %v1013 = vpack.c.b16 %v1012, %v1011
        %v1016 = vsel %vm429, %v946, 0
        %v1019 = vsel %vm429, %v948, 0
        %v1022 = vsel %vm429, %v950, 0
        %v1025 = vsel %vm429, %v952, 0
        %v1028 = vsel %vm429, %v954, 0
        %v1031 = vsel %vm429, %v956, 0
        %v1034 = vsel %vm429, %v958, 0
        %v1037 = vsel %vm429, %v960, 0
        %v1040 = vsel %vm429, %v962, 0
        %v1043 = vsel %vm429, %v964, 0
        %v1046 = vsel %vm429, %v966, 0
        %v1049 = vsel %vm429, %v968, 0
        %v1052 = vsel %vm429, %v970, 0
        %v1055 = vsel %vm429, %v972, 0
        %v1058 = vsel %vm429, %v974, 0
        %v1061 = vsel %vm429, %v976, 0
        %v1064 = vsel %vm429, %v978, 0
        %v1067 = vsel %vm429, %v980, 0
        %v1070 = vsel %vm429, %v982, 0
        %v1073 = vsel %vm429, %v984, 0
        %v1076 = vsel %vm429, %v986, 0
        %v1079 = vsel %vm429, %v988, 0
        %v1082 = vsel %vm429, %v990, 0
        %v1085 = vsel %vm429, %v992, 0
        %v1088 = vsel %vm429, %v994, 0
        %v1091 = vsel %vm429, %v996, 0
        %v1094 = vsel %vm429, %v998, 0
        %v1097 = vsel %vm429, %v1000, 0
        %v1100 = vsel %vm429, %v1002, 0
        %v1103 = vsel %vm429, %v1004, 0
        %v1106 = vsel %vm429, %v1006, 0
        %v1109 = vsel %vm429, %v1008, 0
        %1111 = vmatprep.subr.bf16.mxu0 0
        %1112 = vmatpush1.bf16.msra.mxu0 %v1013
        %1113 = vmatprep.subr.bf16.mxu0 0
        %1114 = vmatpush1.bf16.msra.mxu0 0
        %1115 = vmatprep.subr.bf16.mxu0 0
        %1116 = vmatpush1.bf16.msra.mxu0 0
        %1117 = vmatprep.subr.bf16.mxu0 0
        %1118 = vmatpush1.bf16.msra.mxu0 0
        %1119 = vmatprep.subr.bf16.mxu0 0
        %1120 = vmatpush1.bf16.msra.mxu0 0
        %1121 = vmatprep.subr.bf16.mxu0 0
        %1122 = vmatpush1.bf16.msra.mxu0 0
        %1123 = vmatprep.subr.bf16.mxu0 0
        %1124 = vmatpush1.bf16.msra.mxu0 0
        %1125 = vmatprep.subr.bf16.mxu0 0
        %1126 = vmatpush1.bf16.msra.mxu0 0
        %1127 = vmatprep.subr.bf16.mxu0 0
        %1128 = vmatpush1.bf16.msra.mxu0 0
        %1129 = vmatprep.subr.bf16.mxu0 0
        %1130 = vmatpush1.bf16.msra.mxu0 0
        %1131 = vmatprep.subr.bf16.mxu0 0
        %1132 = vmatpush1.bf16.msra.mxu0 0
        %1133 = vmatprep.subr.bf16.mxu0 0
        %1134 = vmatpush1.bf16.msra.mxu0 0
        %1135 = vmatprep.subr.bf16.mxu0 0
        %1136 = vmatpush1.bf16.msra.mxu0 0
        %1137 = vmatprep.subr.bf16.mxu0 0
        %1138 = vmatpush1.bf16.msra.mxu0 0
        %1139 = vmatprep.subr.bf16.mxu0 0
        %1140 = vmatpush1.bf16.msra.mxu0 0
        %1141 = vmatprep.subr.bf16.mxu0 0
        %1142 = vmatpush1.bf16.msra.mxu0 0
        %1143 = vmatprep.mubr.bf16.mxu0 0
        %1144 = vmatmul.mubr.bf16.gmra.mrb[0].mxu0 %v1016
        %v1145 = vpop.f32.mrb[0].mxu0
        %v1146 = vadd.f32 0.0, %v1145
        %v1147 = vpop.f32.mrb[0].mxu0
        %v1148 = vpop.f32.mrb[0].mxu0
        %v1149 = vadd.f32 0.0, %v1148
        %v1150 = vpop.f32.mrb[0].mxu0
        %1151 = vmatprep.mubr.bf16.mxu0 0
        %1152 = vmatmul.mubr.bf16.gmra.mrb[0].mxu0 %v1019
        %v1153 = vpop.f32.mrb[0].mxu0
        %v1154 = vadd.f32 0.0, %v1153
        %v1155 = vpop.f32.mrb[0].mxu0
        %v1156 = vpop.f32.mrb[0].mxu0
        %v1157 = vadd.f32 0.0, %v1156
        %v1158 = vpop.f32.mrb[0].mxu0
        %1159 = vmatprep.mubr.bf16.mxu0 0
        %1160 = vmatmul.mubr.bf16.gmra.mrb[0].mxu0 %v1022
        %v1161 = vpop.f32.mrb[0].mxu0
        %v1162 = vadd.f32 0.0, %v1161
        %v1163 = vpop.f32.mrb[0].mxu0
        %v1164 = vpop.f32.mrb[0].mxu0
        %v1165 = vadd.f32 0.0, %v1164
        %v1166 = vpop.f32.mrb[0].mxu0
        %1167 = vmatprep.mubr.bf16.mxu0 0
        %1168 = vmatmul.mubr.bf16.gmra.mrb[0].mxu0 %v1025
        %v1169 = vpop.f32.mrb[0].mxu0
        %v1170 = vadd.f32 0.0, %v1169
        %v1171 = vpop.f32.mrb[0].mxu0
        %v1172 = vpop.f32.mrb[0].mxu0
        %v1173 = vadd.f32 0.0, %v1172
        %v1174 = vpop.f32.mrb[0].mxu0
        %1175 = vmatprep.mubr.bf16.mxu0 0
        %1176 = vmatmul.mubr.bf16.gmra.mrb[0].mxu0 %v1028
        %v1177 = vpop.f32.mrb[0].mxu0
        %v1178 = vadd.f32 0.0, %v1177
        %v1179 = vpop.f32.mrb[0].mxu0
        %v1180 = vpop.f32.mrb[0].mxu0
        %v1181 = vadd.f32 0.0, %v1180
        %v1182 = vpop.f32.mrb[0].mxu0
        %1183 = vmatprep.mubr.bf16.mxu0 0
        %1184 = vmatmul.mubr.bf16.gmra.mrb[0].mxu0 %v1031
        %v1185 = vpop.f32.mrb[0].mxu0
        %v1186 = vadd.f32 0.0, %v1185
        %v1187 = vpop.f32.mrb[0].mxu0
        %v1188 = vpop.f32.mrb[0].mxu0
        %v1189 = vadd.f32 0.0, %v1188
        %v1190 = vpop.f32.mrb[0].mxu0
        %1191 = vmatprep.mubr.bf16.mxu0 0
        %1192 = vmatmul.mubr.bf16.gmra.mrb[0].mxu0 %v1034
        %v1193 = vpop.f32.mrb[0].mxu0
        %v1194 = vadd.f32 0.0, %v1193
        %v1195 = vpop.f32.mrb[0].mxu0
        %v1196 = vpop.f32.mrb[0].mxu0
        %v1197 = vadd.f32 0.0, %v1196
        %v1198 = vpop.f32.mrb[0].mxu0
        %1199 = vmatprep.mubr.bf16.mxu0 0
        %1200 = vmatmul.mubr.bf16.gmra.mrb[0].mxu0 %v1037
        %v1201 = vpop.f32.mrb[0].mxu0
        %v1202 = vadd.f32 0.0, %v1201
        %v1203 = vpop.f32.mrb[0].mxu0
        %v1204 = vpop.f32.mrb[0].mxu0
        %v1205 = vadd.f32 0.0, %v1204
        %v1206 = vpop.f32.mrb[0].mxu0
        %1207 = vmatprep.mubr.bf16.mxu0 0
        %1208 = vmatmul.mubr.bf16.gmra.mrb[0].mxu0 %v1040
        %v1209 = vpop.f32.mrb[0].mxu0
        %v1210 = vadd.f32 0.0, %v1209
        %v1211 = vpop.f32.mrb[0].mxu0
        %v1212 = vpop.f32.mrb[0].mxu0
        %v1213 = vadd.f32 0.0, %v1212
        %v1214 = vpop.f32.mrb[0].mxu0
        %1215 = vmatprep.mubr.bf16.mxu0 0
        %1216 = vmatmul.mubr.bf16.gmra.mrb[0].mxu0 %v1043
        %v1217 = vpop.f32.mrb[0].mxu0
        %v1218 = vadd.f32 0.0, %v1217
        %v1219 = vpop.f32.mrb[0].mxu0
        %v1220 = vpop.f32.mrb[0].mxu0
        %v1221 = vadd.f32 0.0, %v1220
        %v1222 = vpop.f32.mrb[0].mxu0
        %1223 = vmatprep.mubr.bf16.mxu0 0
        %1224 = vmatmul.mubr.bf16.gmra.mrb[0].mxu0 %v1046
        %v1225 = vpop.f32.mrb[0].mxu0
        %v1226 = vadd.f32 0.0, %v1225
        %v1227 = vpop.f32.mrb[0].mxu0
        %v1228 = vpop.f32.mrb[0].mxu0
        %v1229 = vadd.f32 0.0, %v1228
        %v1230 = vpop.f32.mrb[0].mxu0
        %1231 = vmatprep.mubr.bf16.mxu0 0
        %1232 = vmatmul.mubr.bf16.gmra.mrb[0].mxu0 %v1049
        %v1233 = vpop.f32.mrb[0].mxu0
        %v1234 = vadd.f32 0.0, %v1233
        %v1235 = vpop.f32.mrb[0].mxu0
        %v1236 = vpop.f32.mrb[0].mxu0
        %v1237 = vadd.f32 0.0, %v1236
        %v1238 = vpop.f32.mrb[0].mxu0
        %1239 = vmatprep.mubr.bf16.mxu0 0
        %1240 = vmatmul.mubr.bf16.gmra.mrb[0].mxu0 %v1052
        %v1241 = vpop.f32.mrb[0].mxu0
        %v1242 = vadd.f32 0.0, %v1241
        %v1243 = vpop.f32.mrb[0].mxu0
        %v1244 = vpop.f32.mrb[0].mxu0
        %v1245 = vadd.f32 0.0, %v1244
        %v1246 = vpop.f32.mrb[0].mxu0
        %1247 = vmatprep.mubr.bf16.mxu0 0
        %1248 = vmatmul.mubr.bf16.gmra.mrb[0].mxu0 %v1055
        %v1249 = vpop.f32.mrb[0].mxu0
        %v1250 = vadd.f32 0.0, %v1249
        %v1251 = vpop.f32.mrb[0].mxu0
        %v1252 = vpop.f32.mrb[0].mxu0
        %v1253 = vadd.f32 0.0, %v1252
        %v1254 = vpop.f32.mrb[0].mxu0
        %1255 = vmatprep.mubr.bf16.mxu0 0
        %1256 = vmatmul.mubr.bf16.gmra.mrb[0].mxu0 %v1058
        %v1257 = vpop.f32.mrb[0].mxu0
        %v1258 = vadd.f32 0.0, %v1257
        %v1259 = vpop.f32.mrb[0].mxu0
        %v1260 = vpop.f32.mrb[0].mxu0
        %v1261 = vadd.f32 0.0, %v1260
        %v1262 = vpop.f32.mrb[0].mxu0
        %1263 = vmatprep.mubr.bf16.mxu0 0
        %1264 = vmatmul.mubr.bf16.gmra.mrb[0].mxu0 %v1061
        %v1265 = vpop.f32.mrb[0].mxu0
        %v1266 = vadd.f32 0.0, %v1265
        %v1267 = vpop.f32.mrb[0].mxu0
        %v1268 = vpop.f32.mrb[0].mxu0
        %v1269 = vadd.f32 0.0, %v1268
        %v1270 = vpop.f32.mrb[0].mxu0
        %1271 = vmatprep.mubr.bf16.mxu0 0
        %1272 = vmatmul.mubr.bf16.gmra.mrb[0].mxu0 %v1064
        %v1273 = vpop.f32.mrb[0].mxu0
        %v1274 = vadd.f32 0.0, %v1273
        %v1275 = vpop.f32.mrb[0].mxu0
        %v1276 = vpop.f32.mrb[0].mxu0
        %v1277 = vadd.f32 0.0, %v1276
        %v1278 = vpop.f32.mrb[0].mxu0
        %1279 = vmatprep.mubr.bf16.mxu0 0
        %1280 = vmatmul.mubr.bf16.gmra.mrb[0].mxu0 %v1067
        %v1281 = vpop.f32.mrb[0].mxu0
        %v1282 = vadd.f32 0.0, %v1281
        %v1283 = vpop.f32.mrb[0].mxu0
        %v1284 = vpop.f32.mrb[0].mxu0
        %v1285 = vadd.f32 0.0, %v1284
        %v1286 = vpop.f32.mrb[0].mxu0
        %1287 = vmatprep.mubr.bf16.mxu0 0
        %1288 = vmatmul.mubr.bf16.gmra.mrb[0].mxu0 %v1070
        %v1289 = vpop.f32.mrb[0].mxu0
        %v1290 = vadd.f32 0.0, %v1289
        %v1291 = vpop.f32.mrb[0].mxu0
        %v1292 = vpop.f32.mrb[0].mxu0
        %v1293 = vadd.f32 0.0, %v1292
        %v1294 = vpop.f32.mrb[0].mxu0
        %1295 = vmatprep.mubr.bf16.mxu0 0
        %1296 = vmatmul.mubr.bf16.gmra.mrb[0].mxu0 %v1073
        %v1297 = vpop.f32.mrb[0].mxu0
        %v1298 = vadd.f32 0.0, %v1297
        %v1299 = vpop.f32.mrb[0].mxu0
        %v1300 = vpop.f32.mrb[0].mxu0
        %v1301 = vadd.f32 0.0, %v1300
        %v1302 = vpop.f32.mrb[0].mxu0
        %1303 = vmatprep.mubr.bf16.mxu0 0
        %1304 = vmatmul.mubr.bf16.gmra.mrb[0].mxu0 %v1076
        %v1305 = vpop.f32.mrb[0].mxu0
        %v1306 = vadd.f32 0.0, %v1305
        %v1307 = vpop.f32.mrb[0].mxu0
        %v1308 = vpop.f32.mrb[0].mxu0
        %v1309 = vadd.f32 0.0, %v1308
        %v1310 = vpop.f32.mrb[0].mxu0
        %1311 = vmatprep.mubr.bf16.mxu0 0
        %1312 = vmatmul.mubr.bf16.gmra.mrb[0].mxu0 %v1079
        %v1313 = vpop.f32.mrb[0].mxu0
        %v1314 = vadd.f32 0.0, %v1313
        %v1315 = vpop.f32.mrb[0].mxu0
        %v1316 = vpop.f32.mrb[0].mxu0
        %v1317 = vadd.f32 0.0, %v1316
        %v1318 = vpop.f32.mrb[0].mxu0
        %1319 = vmatprep.mubr.bf16.mxu0 0
        %1320 = vmatmul.mubr.bf16.gmra.mrb[0].mxu0 %v1082
        %v1321 = vpop.f32.mrb[0].mxu0
        %v1322 = vadd.f32 0.0, %v1321
        %v1323 = vpop.f32.mrb[0].mxu0
        %v1324 = vpop.f32.mrb[0].mxu0
        %v1325 = vadd.f32 0.0, %v1324
        %v1326 = vpop.f32.mrb[0].mxu0
        %1327 = vmatprep.mubr.bf16.mxu0 0
        %1328 = vmatmul.mubr.bf16.gmra.mrb[0].mxu0 %v1085
        %v1329 = vpop.f32.mrb[0].mxu0
        %v1330 = vadd.f32 0.0, %v1329
        %v1331 = vpop.f32.mrb[0].mxu0
        %v1332 = vpop.f32.mrb[0].mxu0
        %v1333 = vadd.f32 0.0, %v1332
        %v1334 = vpop.f32.mrb[0].mxu0
        %1335 = vmatprep.mubr.bf16.mxu0 0
        %1336 = vmatmul.mubr.bf16.gmra.mrb[0].mxu0 %v1088
        %v1337 = vpop.f32.mrb[0].mxu0
        %v1338 = vadd.f32 0.0, %v1337
        %v1339 = vpop.f32.mrb[0].mxu0
        %v1340 = vpop.f32.mrb[0].mxu0
        %v1341 = vadd.f32 0.0, %v1340
        %v1342 = vpop.f32.mrb[0].mxu0
        %1343 = vmatprep.mubr.bf16.mxu0 0
        %1344 = vmatmul.mubr.bf16.gmra.mrb[0].mxu0 %v1091
        %v1345 = vpop.f32.mrb[0].mxu0
        %v1346 = vadd.f32 0.0, %v1345
        %v1347 = vpop.f32.mrb[0].mxu0
        %v1348 = vpop.f32.mrb[0].mxu0
        %v1349 = vadd.f32 0.0, %v1348
        %v1350 = vpop.f32.mrb[0].mxu0
        %1351 = vmatprep.mubr.bf16.mxu0 0
        %1352 = vmatmul.mubr.bf16.gmra.mrb[0].mxu0 %v1094
        %v1353 = vpop.f32.mrb[0].mxu0
        %v1354 = vadd.f32 0.0, %v1353
        %v1355 = vpop.f32.mrb[0].mxu0
        %v1356 = vpop.f32.mrb[0].mxu0
        %v1357 = vadd.f32 0.0, %v1356
        %v1358 = vpop.f32.mrb[0].mxu0
        %1359 = vmatprep.mubr.bf16.mxu0 0
        %1360 = vmatmul.mubr.bf16.gmra.mrb[0].mxu0 %v1097
        %v1361 = vpop.f32.mrb[0].mxu0
        %v1362 = vadd.f32 0.0, %v1361
        %v1363 = vpop.f32.mrb[0].mxu0
        %v1364 = vpop.f32.mrb[0].mxu0
        %v1365 = vadd.f32 0.0, %v1364
        %v1366 = vpop.f32.mrb[0].mxu0
        %1367 = vmatprep.mubr.bf16.mxu0 0
        %1368 = vmatmul.mubr.bf16.gmra.mrb[0].mxu0 %v1100
        %v1369 = vpop.f32.mrb[0].mxu0
        %v1370 = vadd.f32 0.0, %v1369
        %v1371 = vpop.f32.mrb[0].mxu0
        %v1372 = vpop.f32.mrb[0].mxu0
        %v1373 = vadd.f32 0.0, %v1372
        %v1374 = vpop.f32.mrb[0].mxu0
        %1375 = vmatprep.mubr.bf16.mxu0 0
        %1376 = vmatmul.mubr.bf16.gmra.mrb[0].mxu0 %v1103
        %v1377 = vpop.f32.mrb[0].mxu0
        %v1378 = vadd.f32 0.0, %v1377
        %v1379 = vpop.f32.mrb[0].mxu0
        %v1380 = vpop.f32.mrb[0].mxu0
        %v1381 = vadd.f32 0.0, %v1380
        %v1382 = vpop.f32.mrb[0].mxu0
        %1383 = vmatprep.mubr.bf16.mxu0 0
        %1384 = vmatmul.mubr.bf16.gmra.mrb[0].mxu0 %v1106
        %v1385 = vpop.f32.mrb[0].mxu0
        %v1386 = vadd.f32 0.0, %v1385
        %v1387 = vpop.f32.mrb[0].mxu0
        %v1388 = vpop.f32.mrb[0].mxu0
        %v1389 = vadd.f32 0.0, %v1388
        %v1390 = vpop.f32.mrb[0].mxu0
        %1391 = vmatprep.mubr.bf16.mxu0 0
        %1392 = vmatmul.mubr.bf16.gmra.mrb[0].mxu0 %v1109
        %v1393 = vpop.f32.mrb[0].mxu0
        %v1394 = vadd.f32 0.0, %v1393
        %v1395 = vpop.f32.mrb[0].mxu0
        %v1396 = vpop.f32.mrb[0].mxu0
        %v1397 = vadd.f32 0.0, %v1396
        %v1398 = vpop.f32.mrb[0].mxu0
        %1399 = vdwg.mxu0
        %v1400 = vxor.u32 %v1146, 2147483648
        %v1401 = vxor.u32 %v1149, 2147483648
        %v1402 = vxor.u32 %v1154, 2147483648
        %v1403 = vxor.u32 %v1157, 2147483648
        %v1404 = vxor.u32 %v1162, 2147483648
        %v1405 = vxor.u32 %v1165, 2147483648
        %v1406 = vxor.u32 %v1170, 2147483648
        %v1407 = vxor.u32 %v1173, 2147483648
        %v1408 = vxor.u32 %v1178, 2147483648
        %v1409 = vxor.u32 %v1181, 2147483648
        %v1410 = vxor.u32 %v1186, 2147483648
        %v1411 = vxor.u32 %v1189, 2147483648
        %v1412 = vxor.u32 %v1194, 2147483648
        %v1413 = vxor.u32 %v1197, 2147483648
        %v1414 = vxor.u32 %v1202, 2147483648
        %v1415 = vxor.u32 %v1205, 2147483648
        %v1416 = vxor.u32 %v1210, 2147483648
        %v1417 = vxor.u32 %v1213, 2147483648
        %v1418 = vxor.u32 %v1218, 2147483648
        %v1419 = vxor.u32 %v1221, 2147483648
        %v1420 = vxor.u32 %v1226, 2147483648
        %v1421 = vxor.u32 %v1229, 2147483648
        %v1422 = vxor.u32 %v1234, 2147483648
        %v1423 = vxor.u32 %v1237, 2147483648
        %v1424 = vxor.u32 %v1242, 2147483648
        %v1425 = vxor.u32 %v1245, 2147483648
        %v1426 = vxor.u32 %v1250, 2147483648
        %v1427 = vxor.u32 %v1253, 2147483648
        %v1428 = vxor.u32 %v1258, 2147483648
        %v1429 = vxor.u32 %v1261, 2147483648
        %v1430 = vxor.u32 %v1266, 2147483648
        %v1431 = vxor.u32 %v1269, 2147483648
        %v1432 = vxor.u32 %v1274, 2147483648
        %v1433 = vxor.u32 %v1277, 2147483648
        %v1434 = vxor.u32 %v1282, 2147483648
        %v1435 = vxor.u32 %v1285, 2147483648
        %v1436 = vxor.u32 %v1290, 2147483648
        %v1437 = vxor.u32 %v1293, 2147483648
        %v1438 = vxor.u32 %v1298, 2147483648
        %v1439 = vxor.u32 %v1301, 2147483648
        %v1440 = vxor.u32 %v1306, 2147483648
        %v1441 = vxor.u32 %v1309, 2147483648
        %v1442 = vxor.u32 %v1314, 2147483648
        %v1443 = vxor.u32 %v1317, 2147483648
        %v1444 = vxor.u32 %v1322, 2147483648
        %v1445 = vxor.u32 %v1325, 2147483648
        %v1446 = vxor.u32 %v1330, 2147483648
        %v1447 = vxor.u32 %v1333, 2147483648
        %v1448 = vxor.u32 %v1338, 2147483648
        %v1449 = vxor.u32 %v1341, 2147483648
        %v1450 = vxor.u32 %v1346, 2147483648
        %v1451 = vxor.u32 %v1349, 2147483648
        %v1452 = vxor.u32 %v1354, 2147483648
        %v1453 = vxor.u32 %v1357, 2147483648
        %v1454 = vxor.u32 %v1362, 2147483648
        %v1455 = vxor.u32 %v1365, 2147483648
        %v1456 = vxor.u32 %v1370, 2147483648
        %v1457 = vxor.u32 %v1373, 2147483648
        %v1458 = vxor.u32 %v1378, 2147483648
        %v1459 = vxor.u32 %v1381, 2147483648
        %v1460 = vxor.u32 %v1386, 2147483648
        %v1461 = vxor.u32 %v1389, 2147483648
        %v1462 = vxor.u32 %v1394, 2147483648
        %v1463 = vxor.u32 %v1397, 2147483648
        %v1464 = vmul.f32 %v1400, 1.442695
        %v1465 = vpow.pop %v1464
        %v1466 = vmul.f32 %v1401, 1.442695
        %v1467 = vpow.pop %v1466
        %v1468 = vmul.f32 %v1402, 1.442695
        %v1469 = vpow.pop %v1468
        %v1470 = vmul.f32 %v1403, 1.442695
        %v1471 = vpow.pop %v1470
        %v1472 = vmul.f32 %v1404, 1.442695
        %v1473 = vpow.pop %v1472
        %v1474 = vmul.f32 %v1405, 1.442695
        %v1475 = vpow.pop %v1474
        %v1476 = vmul.f32 %v1406, 1.442695
        %v1477 = vpow.pop %v1476
        %v1478 = vmul.f32 %v1407, 1.442695
        %v1479 = vpow.pop %v1478
        %v1480 = vmul.f32 %v1408, 1.442695
        %v1481 = vpow.pop %v1480
        %v1482 = vmul.f32 %v1409, 1.442695
        %v1483 = vpow.pop %v1482
        %v1484 = vmul.f32 %v1410, 1.442695
        %v1485 = vpow.pop %v1484
        %v1486 = vmul.f32 %v1411, 1.442695
        %v1487 = vpow.pop %v1486
        %v1488 = vmul.f32 %v1412, 1.442695
        %v1489 = vpow.pop %v1488
        %v1490 = vmul.f32 %v1413, 1.442695
        %v1491 = vpow.pop %v1490
        %v1492 = vmul.f32 %v1414, 1.442695
        %v1493 = vpow.pop %v1492
        %v1494 = vmul.f32 %v1415, 1.442695
        %v1495 = vpow.pop %v1494
        %v1496 = vmul.f32 %v1416, 1.442695
        %v1497 = vpow.pop %v1496
        %v1498 = vmul.f32 %v1417, 1.442695
        %v1499 = vpow.pop %v1498
        %v1500 = vmul.f32 %v1418, 1.442695
        %v1501 = vpow.pop %v1500
        %v1502 = vmul.f32 %v1419, 1.442695
        %v1503 = vpow.pop %v1502
        %v1504 = vmul.f32 %v1420, 1.442695
        %v1505 = vpow.pop %v1504
        %v1506 = vmul.f32 %v1421, 1.442695
        %v1507 = vpow.pop %v1506
        %v1508 = vmul.f32 %v1422, 1.442695
        %v1509 = vpow.pop %v1508
        %v1510 = vmul.f32 %v1423, 1.442695
        %v1511 = vpow.pop %v1510
        %v1512 = vmul.f32 %v1424, 1.442695
        %v1513 = vpow.pop %v1512
        %v1514 = vmul.f32 %v1425, 1.442695
        %v1515 = vpow.pop %v1514
        %v1516 = vmul.f32 %v1426, 1.442695
        %v1517 = vpow.pop %v1516
        %v1518 = vmul.f32 %v1427, 1.442695
        %v1519 = vpow.pop %v1518
        %v1520 = vmul.f32 %v1428, 1.442695
        %v1521 = vpow.pop %v1520
        %v1522 = vmul.f32 %v1429, 1.442695
        %v1523 = vpow.pop %v1522
        %v1524 = vmul.f32 %v1430, 1.442695
        %v1525 = vpow.pop %v1524
        %v1526 = vmul.f32 %v1431, 1.442695
        %v1527 = vpow.pop %v1526
        %v1528 = vmul.f32 %v1432, 1.442695
        %v1529 = vpow.pop %v1528
        %v1530 = vmul.f32 %v1433, 1.442695
        %v1531 = vpow.pop %v1530
        %v1532 = vmul.f32 %v1434, 1.442695
        %v1533 = vpow.pop %v1532
        %v1534 = vmul.f32 %v1435, 1.442695
        %v1535 = vpow.pop %v1534
        %v1536 = vmul.f32 %v1436, 1.442695
        %v1537 = vpow.pop %v1536
        %v1538 = vmul.f32 %v1437, 1.442695
        %v1539 = vpow.pop %v1538
        %v1540 = vmul.f32 %v1438, 1.442695
        %v1541 = vpow.pop %v1540
        %v1542 = vmul.f32 %v1439, 1.442695
        %v1543 = vpow.pop %v1542
        %v1544 = vmul.f32 %v1440, 1.442695
        %v1545 = vpow.pop %v1544
        %v1546 = vmul.f32 %v1441, 1.442695
        %v1547 = vpow.pop %v1546
        %v1548 = vmul.f32 %v1442, 1.442695
        %v1549 = vpow.pop %v1548
        %v1550 = vmul.f32 %v1443, 1.442695
        %v1551 = vpow.pop %v1550
        %v1552 = vmul.f32 %v1444, 1.442695
        %v1553 = vpow.pop %v1552
        %v1554 = vmul.f32 %v1445, 1.442695
        %v1555 = vpow.pop %v1554
        %v1556 = vmul.f32 %v1446, 1.442695
        %v1557 = vpow.pop %v1556
        %v1558 = vmul.f32 %v1447, 1.442695
        %v1559 = vpow.pop %v1558
        %v1560 = vmul.f32 %v1448, 1.442695
        %v1561 = vpow.pop %v1560
        %v1562 = vmul.f32 %v1449, 1.442695
        %v1563 = vpow.pop %v1562
        %v1564 = vmul.f32 %v1450, 1.442695
        %v1565 = vpow.pop %v1564
        %v1566 = vmul.f32 %v1451, 1.442695
        %v1567 = vpow.pop %v1566
        %v1568 = vmul.f32 %v1452, 1.442695
        %v1569 = vpow.pop %v1568
        %v1570 = vmul.f32 %v1453, 1.442695
        %v1571 = vpow.pop %v1570
        %v1572 = vmul.f32 %v1454, 1.442695
        %v1573 = vpow.pop %v1572
        %v1574 = vmul.f32 %v1455, 1.442695
        %v1575 = vpow.pop %v1574
        %v1576 = vmul.f32 %v1456, 1.442695
        %v1577 = vpow.pop %v1576
        %v1578 = vmul.f32 %v1457, 1.442695
        %v1579 = vpow.pop %v1578
        %v1580 = vmul.f32 %v1458, 1.442695
        %v1581 = vpow.pop %v1580
        %v1582 = vmul.f32 %v1459, 1.442695
        %v1583 = vpow.pop %v1582
        %v1584 = vmul.f32 %v1460, 1.442695
        %v1585 = vpow.pop %v1584
        %v1586 = vmul.f32 %v1461, 1.442695
        %v1587 = vpow.pop %v1586
        %v1588 = vmul.f32 %v1462, 1.442695
        %v1589 = vpow.pop %v1588
        %v1590 = vmul.f32 %v1463, 1.442695
        %v1591 = vpow.pop %v1590
        %v1592 = vadd.f32 %v1465, 1.0
        %v1593 = vadd.f32 %v1467, 1.0
        %v1594 = vadd.f32 %v1469, 1.0
        %v1595 = vadd.f32 %v1471, 1.0
        %v1596 = vadd.f32 %v1473, 1.0
        %v1597 = vadd.f32 %v1475, 1.0
        %v1598 = vadd.f32 %v1477, 1.0
        %v1599 = vadd.f32 %v1479, 1.0
        %v1600 = vadd.f32 %v1481, 1.0
        %v1601 = vadd.f32 %v1483, 1.0
        %v1602 = vadd.f32 %v1485, 1.0
        %v1603 = vadd.f32 %v1487, 1.0
        %v1604 = vadd.f32 %v1489, 1.0
        %v1605 = vadd.f32 %v1491, 1.0
        %v1606 = vadd.f32 %v1493, 1.0
        %v1607 = vadd.f32 %v1495, 1.0
        %v1608 = vadd.f32 %v1497, 1.0
        %v1609 = vadd.f32 %v1499, 1.0
        %v1610 = vadd.f32 %v1501, 1.0
        %v1611 = vadd.f32 %v1503, 1.0
        %v1612 = vadd.f32 %v1505, 1.0
        %v1613 = vadd.f32 %v1507, 1.0
        %v1614 = vadd.f32 %v1509, 1.0
        %v1615 = vadd.f32 %v1511, 1.0
        %v1616 = vadd.f32 %v1513, 1.0
        %v1617 = vadd.f32 %v1515, 1.0
        %v1618 = vadd.f32 %v1517, 1.0
        %v1619 = vadd.f32 %v1519, 1.0
        %v1620 = vadd.f32 %v1521, 1.0
        %v1621 = vadd.f32 %v1523, 1.0
        %v1622 = vadd.f32 %v1525, 1.0
        %v1623 = vadd.f32 %v1527, 1.0
        %v1624 = vadd.f32 %v1529, 1.0
        %v1625 = vadd.f32 %v1531, 1.0
        %v1626 = vadd.f32 %v1533, 1.0
        %v1627 = vadd.f32 %v1535, 1.0
        %v1628 = vadd.f32 %v1537, 1.0
        %v1629 = vadd.f32 %v1539, 1.0
        %v1630 = vadd.f32 %v1541, 1.0
        %v1631 = vadd.f32 %v1543, 1.0
        %v1632 = vadd.f32 %v1545, 1.0
        %v1633 = vadd.f32 %v1547, 1.0
        %v1634 = vadd.f32 %v1549, 1.0
        %v1635 = vadd.f32 %v1551, 1.0
        %v1636 = vadd.f32 %v1553, 1.0
        %v1637 = vadd.f32 %v1555, 1.0
        %v1638 = vadd.f32 %v1557, 1.0
        %v1639 = vadd.f32 %v1559, 1.0
        %v1640 = vadd.f32 %v1561, 1.0
        %v1641 = vadd.f32 %v1563, 1.0
        %v1642 = vadd.f32 %v1565, 1.0
        %v1643 = vadd.f32 %v1567, 1.0
        %v1644 = vadd.f32 %v1569, 1.0
        %v1645 = vadd.f32 %v1571, 1.0
        %v1646 = vadd.f32 %v1573, 1.0
        %v1647 = vadd.f32 %v1575, 1.0
        %v1648 = vadd.f32 %v1577, 1.0
        %v1649 = vadd.f32 %v1579, 1.0
        %v1650 = vadd.f32 %v1581, 1.0
        %v1651 = vadd.f32 %v1583, 1.0
        %v1652 = vadd.f32 %v1585, 1.0
        %v1653 = vadd.f32 %v1587, 1.0
        %v1654 = vadd.f32 %v1589, 1.0
        %v1655 = vadd.f32 %v1591, 1.0
        %v1656 = vrcp.pop %v1592
        %v1657 = vmul.f32 1.0, %v1656
        %v1658 = vrcp.pop %v1593
        %v1659 = vmul.f32 1.0, %v1658
        %v1660 = vrcp.pop %v1594
        %v1661 = vmul.f32 1.0, %v1660
        %v1662 = vrcp.pop %v1595
        %v1663 = vmul.f32 1.0, %v1662
        %v1664 = vrcp.pop %v1596
        %v1665 = vmul.f32 1.0, %v1664
        %v1666 = vrcp.pop %v1597
        %v1667 = vmul.f32 1.0, %v1666
        %v1668 = vrcp.pop %v1598
        %v1669 = vmul.f32 1.0, %v1668
        %v1670 = vrcp.pop %v1599
        %v1671 = vmul.f32 1.0, %v1670
        %v1672 = vrcp.pop %v1600
        %v1673 = vmul.f32 1.0, %v1672
        %v1674 = vrcp.pop %v1601
        %v1675 = vmul.f32 1.0, %v1674
        %v1676 = vrcp.pop %v1602
        %v1677 = vmul.f32 1.0, %v1676
        %v1678 = vrcp.pop %v1603
        %v1679 = vmul.f32 1.0, %v1678
        %v1680 = vrcp.pop %v1604
        %v1681 = vmul.f32 1.0, %v1680
        %v1682 = vrcp.pop %v1605
        %v1683 = vmul.f32 1.0, %v1682
        %v1684 = vrcp.pop %v1606
        %v1685 = vmul.f32 1.0, %v1684
        %v1686 = vrcp.pop %v1607
        %v1687 = vmul.f32 1.0, %v1686
        %v1688 = vrcp.pop %v1608
        %v1689 = vmul.f32 1.0, %v1688
        %v1690 = vrcp.pop %v1609
        %v1691 = vmul.f32 1.0, %v1690
        %v1692 = vrcp.pop %v1610
        %v1693 = vmul.f32 1.0, %v1692
        %v1694 = vrcp.pop %v1611
        %v1695 = vmul.f32 1.0, %v1694
        %v1696 = vrcp.pop %v1612
        %v1697 = vmul.f32 1.0, %v1696
        %v1698 = vrcp.pop %v1613
        %v1699 = vmul.f32 1.0, %v1698
        %v1700 = vrcp.pop %v1614
        %v1701 = vmul.f32 1.0, %v1700
        %v1702 = vrcp.pop %v1615
        %v1703 = vmul.f32 1.0, %v1702
        %v1704 = vrcp.pop %v1616
        %v1705 = vmul.f32 1.0, %v1704
        %v1706 = vrcp.pop %v1617
        %v1707 = vmul.f32 1.0, %v1706
        %v1708 = vrcp.pop %v1618
        %v1709 = vmul.f32 1.0, %v1708
        %v1710 = vrcp.pop %v1619
        %v1711 = vmul.f32 1.0, %v1710
        %v1712 = vrcp.pop %v1620
        %v1713 = vmul.f32 1.0, %v1712
        %v1714 = vrcp.pop %v1621
        %v1715 = vmul.f32 1.0, %v1714
        %v1716 = vrcp.pop %v1622
        %v1717 = vmul.f32 1.0, %v1716
        %v1718 = vrcp.pop %v1623
        %v1719 = vmul.f32 1.0, %v1718
        %v1720 = vrcp.pop %v1624
        %v1721 = vmul.f32 1.0, %v1720
        %v1722 = vrcp.pop %v1625
        %v1723 = vmul.f32 1.0, %v1722
        %v1724 = vrcp.pop %v1626
        %v1725 = vmul.f32 1.0, %v1724
        %v1726 = vrcp.pop %v1627
        %v1727 = vmul.f32 1.0, %v1726
        %v1728 = vrcp.pop %v1628
        %v1729 = vmul.f32 1.0, %v1728
        %v1730 = vrcp.pop %v1629
        %v1731 = vmul.f32 1.0, %v1730
        %v1732 = vrcp.pop %v1630
        %v1733 = vmul.f32 1.0, %v1732
        %v1734 = vrcp.pop %v1631
        %v1735 = vmul.f32 1.0, %v1734
        %v1736 = vrcp.pop %v1632
        %v1737 = vmul.f32 1.0, %v1736
        %v1738 = vrcp.pop %v1633
        %v1739 = vmul.f32 1.0, %v1738
        %v1740 = vrcp.pop %v1634
        %v1741 = vmul.f32 1.0, %v1740
        %v1742 = vrcp.pop %v1635
        %v1743 = vmul.f32 1.0, %v1742
        %v1744 = vrcp.pop %v1636
        %v1745 = vmul.f32 1.0, %v1744
        %v1746 = vrcp.pop %v1637
        %v1747 = vmul.f32 1.0, %v1746
        %v1748 = vrcp.pop %v1638
        %v1749 = vmul.f32 1.0, %v1748
        %v1750 = vrcp.pop %v1639
        %v1751 = vmul.f32 1.0, %v1750
        %v1752 = vrcp.pop %v1640
        %v1753 = vmul.f32 1.0, %v1752
        %v1754 = vrcp.pop %v1641
        %v1755 = vmul.f32 1.0, %v1754
        %v1756 = vrcp.pop %v1642
        %v1757 = vmul.f32 1.0, %v1756
        %v1758 = vrcp.pop %v1643
        %v1759 = vmul.f32 1.0, %v1758
        %v1760 = vrcp.pop %v1644
        %v1761 = vmul.f32 1.0, %v1760
        %v1762 = vrcp.pop %v1645
        %v1763 = vmul.f32 1.0, %v1762
        %v1764 = vrcp.pop %v1646
        %v1765 = vmul.f32 1.0, %v1764
        %v1766 = vrcp.pop %v1647
        %v1767 = vmul.f32 1.0, %v1766
        %v1768 = vrcp.pop %v1648
        %v1769 = vmul.f32 1.0, %v1768
        %v1770 = vrcp.pop %v1649
        %v1771 = vmul.f32 1.0, %v1770
        %v1772 = vrcp.pop %v1650
        %v1773 = vmul.f32 1.0, %v1772
        %v1774 = vrcp.pop %v1651
        %v1775 = vmul.f32 1.0, %v1774
        %v1776 = vrcp.pop %v1652
        %v1777 = vmul.f32 1.0, %v1776
        %v1778 = vrcp.pop %v1653
        %v1779 = vmul.f32 1.0, %v1778
        %v1780 = vrcp.pop %v1654
        %v1781 = vmul.f32 1.0, %v1780
        %v1782 = vrcp.pop %v1655
        %v1783 = vmul.f32 1.0, %v1782
        %v1784 = vmul.f32 %v561, %v1657
        %v1785 = vmul.f32 %v564, %v1659
        %v1786 = vmul.f32 %v569, %v1661
        %v1787 = vmul.f32 %v572, %v1663
        %v1788 = vmul.f32 %v577, %v1665
        %v1789 = vmul.f32 %v580, %v1667
        %v1790 = vmul.f32 %v585, %v1669
        %v1791 = vmul.f32 %v588, %v1671
        %v1792 = vmul.f32 %v593, %v1673
        %v1793 = vmul.f32 %v596, %v1675
        %v1794 = vmul.f32 %v601, %v1677
        %v1795 = vmul.f32 %v604, %v1679
        %v1796 = vmul.f32 %v609, %v1681
        %v1797 = vmul.f32 %v612, %v1683
        %v1798 = vmul.f32 %v617, %v1685
        %v1799 = vmul.f32 %v620, %v1687
        %v1800 = vmul.f32 %v625, %v1689
        %v1801 = vmul.f32 %v628, %v1691
        %v1802 = vmul.f32 %v633, %v1693
        %v1803 = vmul.f32 %v636, %v1695
        %v1804 = vmul.f32 %v641, %v1697
        %v1805 = vmul.f32 %v644, %v1699
        %v1806 = vmul.f32 %v649, %v1701
        %v1807 = vmul.f32 %v652, %v1703
        %v1808 = vmul.f32 %v657, %v1705
        %v1809 = vmul.f32 %v660, %v1707
        %v1810 = vmul.f32 %v665, %v1709
        %v1811 = vmul.f32 %v668, %v1711
        %v1812 = vmul.f32 %v673, %v1713
        %v1813 = vmul.f32 %v676, %v1715
        %v1814 = vmul.f32 %v681, %v1717
        %v1815 = vmul.f32 %v684, %v1719
        %v1816 = vmul.f32 %v689, %v1721
        %v1817 = vmul.f32 %v692, %v1723
        %v1818 = vmul.f32 %v697, %v1725
        %v1819 = vmul.f32 %v700, %v1727
        %v1820 = vmul.f32 %v705, %v1729
        %v1821 = vmul.f32 %v708, %v1731
        %v1822 = vmul.f32 %v713, %v1733
        %v1823 = vmul.f32 %v716, %v1735
        %v1824 = vmul.f32 %v721, %v1737
        %v1825 = vmul.f32 %v724, %v1739
        %v1826 = vmul.f32 %v729, %v1741
        %v1827 = vmul.f32 %v732, %v1743
        %v1828 = vmul.f32 %v737, %v1745
        %v1829 = vmul.f32 %v740, %v1747
        %v1830 = vmul.f32 %v745, %v1749
        %v1831 = vmul.f32 %v748, %v1751
        %v1832 = vmul.f32 %v753, %v1753
        %v1833 = vmul.f32 %v756, %v1755
        %v1834 = vmul.f32 %v761, %v1757
        %v1835 = vmul.f32 %v764, %v1759
        %v1836 = vmul.f32 %v769, %v1761
        %v1837 = vmul.f32 %v772, %v1763
        %v1838 = vmul.f32 %v777, %v1765
        %v1839 = vmul.f32 %v780, %v1767
        %v1840 = vmul.f32 %v785, %v1769
        %v1841 = vmul.f32 %v788, %v1771
        %v1842 = vmul.f32 %v793, %v1773
        %v1843 = vmul.f32 %v796, %v1775
        %v1844 = vmul.f32 %v801, %v1777
        %v1845 = vmul.f32 %v804, %v1779
        %v1846 = vmul.f32 %v809, %v1781
        %v1847 = vmul.f32 %v812, %v1783
        %v1848 = vld [vmem:[#allocation2] sm:$0x1]
        %vm1849 = vcmask 261120
        %v1850 = vsel %vm1849, %v561, 0.0
        %v1851 = vsel %vm1849, %v564, 0.0
        %v1852 = vadd.f32 %v1850, %v1851
        %v1853 = vsel %vm1849, %v569, 0.0
        %v1854 = vadd.f32 %v1852, %v1853
        %v1855 = vsel %vm1849, %v572, 0.0
        %v1856 = vadd.f32 %v1854, %v1855
        %v1857 = vsel %vm1849, %v577, 0.0
        %v1858 = vadd.f32 %v1856, %v1857
        %v1859 = vsel %vm1849, %v580, 0.0
        %v1860 = vadd.f32 %v1858, %v1859
        %v1861 = vsel %vm1849, %v585, 0.0
        %v1862 = vadd.f32 %v1860, %v1861
        %v1863 = vsel %vm1849, %v588, 0.0
        %v1864 = vadd.f32 %v1862, %v1863
        %v1865 = vsel %vm1849, %v593, 0.0
        %v1866 = vadd.f32 %v1864, %v1865
        %v1867 = vsel %vm1849, %v596, 0.0
        %v1868 = vadd.f32 %v1866, %v1867
        %v1869 = vsel %vm1849, %v601, 0.0
        %v1870 = vadd.f32 %v1868, %v1869
        %v1871 = vsel %vm1849, %v604, 0.0
        %v1872 = vadd.f32 %v1870, %v1871
        %v1873 = vsel %vm1849, %v609, 0.0
        %v1874 = vadd.f32 %v1872, %v1873
        %v1875 = vsel %vm1849, %v612, 0.0
        %v1876 = vadd.f32 %v1874, %v1875
        %v1877 = vsel %vm1849, %v617, 0.0
        %v1878 = vadd.f32 %v1876, %v1877
        %v1879 = vsel %vm1849, %v620, 0.0
        %v1880 = vadd.f32 %v1878, %v1879
        %v1881 = vsel %vm1849, %v625, 0.0
        %v1882 = vadd.f32 %v1880, %v1881
        %v1883 = vsel %vm1849, %v628, 0.0
        %v1884 = vadd.f32 %v1882, %v1883
        %v1885 = vsel %vm1849, %v633, 0.0
        %v1886 = vadd.f32 %v1884, %v1885
        %v1887 = vsel %vm1849, %v636, 0.0
        %v1888 = vadd.f32 %v1886, %v1887
        %v1889 = vsel %vm1849, %v641, 0.0
        %v1890 = vadd.f32 %v1888, %v1889
        %v1891 = vsel %vm1849, %v644, 0.0
        %v1892 = vadd.f32 %v1890, %v1891
        %v1893 = vsel %vm1849, %v649, 0.0
        %v1894 = vadd.f32 %v1892, %v1893
        %v1895 = vsel %vm1849, %v652, 0.0
        %v1896 = vadd.f32 %v1894, %v1895
        %v1897 = vsel %vm1849, %v657, 0.0
        %v1898 = vadd.f32 %v1896, %v1897
        %v1899 = vsel %vm1849, %v660, 0.0
        %v1900 = vadd.f32 %v1898, %v1899
        %v1901 = vsel %vm1849, %v665, 0.0
        %v1902 = vadd.f32 %v1900, %v1901
        %v1903 = vsel %vm1849, %v668, 0.0
        %v1904 = vadd.f32 %v1902, %v1903
        %v1905 = vsel %vm1849, %v673, 0.0
        %v1906 = vadd.f32 %v1904, %v1905
        %v1907 = vsel %vm1849, %v676, 0.0
        %v1908 = vadd.f32 %v1906, %v1907
        %v1909 = vsel %vm1849, %v681, 0.0
        %v1910 = vadd.f32 %v1908, %v1909
        %v1911 = vsel %vm1849, %v684, 0.0
        %v1912 = vadd.f32 %v1910, %v1911
        %v1913 = vsel %vm1849, %v689, 0.0
        %v1914 = vadd.f32 %v1912, %v1913
        %v1915 = vsel %vm1849, %v692, 0.0
        %v1916 = vadd.f32 %v1914, %v1915
        %v1917 = vsel %vm1849, %v697, 0.0
        %v1918 = vadd.f32 %v1916, %v1917
        %v1919 = vsel %vm1849, %v700, 0.0
        %v1920 = vadd.f32 %v1918, %v1919
        %v1921 = vsel %vm1849, %v705, 0.0
        %v1922 = vadd.f32 %v1920, %v1921
        %v1923 = vsel %vm1849, %v708, 0.0
        %v1924 = vadd.f32 %v1922, %v1923
        %v1925 = vsel %vm1849, %v713, 0.0
        %v1926 = vadd.f32 %v1924, %v1925
        %v1927 = vsel %vm1849, %v716, 0.0
        %v1928 = vadd.f32 %v1926, %v1927
        %v1929 = vsel %vm1849, %v721, 0.0
        %v1930 = vadd.f32 %v1928, %v1929
        %v1931 = vsel %vm1849, %v724, 0.0
        %v1932 = vadd.f32 %v1930, %v1931
        %v1933 = vsel %vm1849, %v729, 0.0
        %v1934 = vadd.f32 %v1932, %v1933
        %v1935 = vsel %vm1849, %v732, 0.0
        %v1936 = vadd.f32 %v1934, %v1935
        %v1937 = vsel %vm1849, %v737, 0.0
        %v1938 = vadd.f32 %v1936, %v1937
        %v1939 = vsel %vm1849, %v740, 0.0
        %v1940 = vadd.f32 %v1938, %v1939
        %v1941 = vsel %vm1849, %v745, 0.0
        %v1942 = vadd.f32 %v1940, %v1941
        %v1943 = vsel %vm1849, %v748, 0.0
        %v1944 = vadd.f32 %v1942, %v1943
        %v1945 = vsel %vm1849, %v753, 0.0
        %v1946 = vadd.f32 %v1944, %v1945
        %v1947 = vsel %vm1849, %v756, 0.0
        %v1948 = vadd.f32 %v1946, %v1947
        %v1949 = vsel %vm1849, %v761, 0.0
        %v1950 = vadd.f32 %v1948, %v1949
        %v1951 = vsel %vm1849, %v764, 0.0
        %v1952 = vadd.f32 %v1950, %v1951
        %v1953 = vsel %vm1849, %v769, 0.0
        %v1954 = vadd.f32 %v1952, %v1953
        %v1955 = vsel %vm1849, %v772, 0.0
        %v1956 = vadd.f32 %v1954, %v1955
        %v1957 = vsel %vm1849, %v777, 0.0
        %v1958 = vadd.f32 %v1956, %v1957
        %v1959 = vsel %vm1849, %v780, 0.0
        %v1960 = vadd.f32 %v1958, %v1959
        %v1961 = vsel %vm1849, %v785, 0.0
        %v1962 = vadd.f32 %v1960, %v1961
        %v1963 = vsel %vm1849, %v788, 0.0
        %v1964 = vadd.f32 %v1962, %v1963
        %v1965 = vsel %vm1849, %v793, 0.0
        %v1966 = vadd.f32 %v1964, %v1965
        %v1967 = vsel %vm1849, %v796, 0.0
        %v1968 = vadd.f32 %v1966, %v1967
        %v1969 = vsel %vm1849, %v801, 0.0
        %v1970 = vadd.f32 %v1968, %v1969
        %v1971 = vsel %vm1849, %v804, 0.0
        %v1972 = vadd.f32 %v1970, %v1971
        %v1973 = vsel %vm1849, %v809, 0.0
        %v1974 = vadd.f32 %v1972, %v1973
        %v1975 = vsel %vm1849, %v812, 0.0
        %v1976 = vadd.f32 %v1974, %v1975
        %v1977 = vrot.slane %v1976, 4
        %v1978 = vadd.f32 %v1976, %v1977
        %v1979 = vrot.slane %v1978, 2
        %v1980 = vadd.f32 %v1978, %v1979
        %v1981 = vrot.slane %v1980, 1
        %v1982 = vadd.f32 %v1980, %v1981
        %v1983 = vadd.f32 %v1848, %v1982
        %vm1984 = vcmask 253952
        %1985 = vst.msk [vmem:[#allocation2] sm:$0x1] %vm1984, %v1983
        %v1986 = vld [vmem:[#allocation2 + $0x1] sm:$0x1]
        %v1987 = vmul.f32 %v561, %v561
        %v1988 = vmul.f32 %v564, %v564
        %v1989 = vmul.f32 %v569, %v569
        %v1990 = vmul.f32 %v572, %v572
        %v1991 = vmul.f32 %v577, %v577
        %v1992 = vmul.f32 %v580, %v580
        %v1993 = vmul.f32 %v585, %v585
        %v1994 = vmul.f32 %v588, %v588
        %v1995 = vmul.f32 %v593, %v593
        %v1996 = vmul.f32 %v596, %v596
        %v1997 = vmul.f32 %v601, %v601
        %v1998 = vmul.f32 %v604, %v604
        %v1999 = vmul.f32 %v609, %v609
        %v2000 = vmul.f32 %v612, %v612
        %v2001 = vmul.f32 %v617, %v617
        %v2002 = vmul.f32 %v620, %v620
        %v2003 = vmul.f32 %v625, %v625
        %v2004 = vmul.f32 %v628, %v628
        %v2005 = vmul.f32 %v633, %v633
        %v2006 = vmul.f32 %v636, %v636
        %v2007 = vmul.f32 %v641, %v641
        %v2008 = vmul.f32 %v644, %v644
        %v2009 = vmul.f32 %v649, %v649
        %v2010 = vmul.f32 %v652, %v652
        %v2011 = vmul.f32 %v657, %v657
        %v2012 = vmul.f32 %v660, %v660
        %v2013 = vmul.f32 %v665, %v665
        %v2014 = vmul.f32 %v668, %v668
        %v2015 = vmul.f32 %v673, %v673
        %v2016 = vmul.f32 %v676, %v676
        %v2017 = vmul.f32 %v681, %v681
        %v2018 = vmul.f32 %v684, %v684
        %v2019 = vmul.f32 %v689, %v689
        %v2020 = vmul.f32 %v692, %v692
        %v2021 = vmul.f32 %v697, %v697
        %v2022 = vmul.f32 %v700, %v700
        %v2023 = vmul.f32 %v705, %v705
        %v2024 = vmul.f32 %v708, %v708
        %v2025 = vmul.f32 %v713, %v713
        %v2026 = vmul.f32 %v716, %v716
        %v2027 = vmul.f32 %v721, %v721
        %v2028 = vmul.f32 %v724, %v724
        %v2029 = vmul.f32 %v729, %v729
        %v2030 = vmul.f32 %v732, %v732
        %v2031 = vmul.f32 %v737, %v737
        %v2032 = vmul.f32 %v740, %v740
        %v2033 = vmul.f32 %v745, %v745
        %v2034 = vmul.f32 %v748, %v748
        %v2035 = vmul.f32 %v753, %v753
        %v2036 = vmul.f32 %v756, %v756
        %v2037 = vmul.f32 %v761, %v761
        %v2038 = vmul.f32 %v764, %v764
        %v2039 = vmul.f32 %v769, %v769
        %v2040 = vmul.f32 %v772, %v772
        %v2041 = vmul.f32 %v777, %v777
        %v2042 = vmul.f32 %v780, %v780
        %v2043 = vmul.f32 %v785, %v785
        %v2044 = vmul.f32 %v788, %v788
        %v2045 = vmul.f32 %v793, %v793
        %v2046 = vmul.f32 %v796, %v796
        %v2047 = vmul.f32 %v801, %v801
        %v2048 = vmul.f32 %v804, %v804
        %v2049 = vmul.f32 %v809, %v809
        %v2050 = vmul.f32 %v812, %v812
        %v2051 = vsel %vm1849, %v1987, 0.0
        %v2052 = vsel %vm1849, %v1988, 0.0
        %v2053 = vadd.f32 %v2051, %v2052
        %v2054 = vsel %vm1849, %v1989, 0.0
        %v2055 = vadd.f32 %v2053, %v2054
        %v2056 = vsel %vm1849, %v1990, 0.0
        %v2057 = vadd.f32 %v2055, %v2056
        %v2058 = vsel %vm1849, %v1991, 0.0
        %v2059 = vadd.f32 %v2057, %v2058
        %v2060 = vsel %vm1849, %v1992, 0.0
        %v2061 = vadd.f32 %v2059, %v2060
        %v2062 = vsel %vm1849, %v1993, 0.0
        %v2063 = vadd.f32 %v2061, %v2062
        %v2064 = vsel %vm1849, %v1994, 0.0
        %v2065 = vadd.f32 %v2063, %v2064
        %v2066 = vsel %vm1849, %v1995, 0.0
        %v2067 = vadd.f32 %v2065, %v2066
        %v2068 = vsel %vm1849, %v1996, 0.0
        %v2069 = vadd.f32 %v2067, %v2068
        %v2070 = vsel %vm1849, %v1997, 0.0
        %v2071 = vadd.f32 %v2069, %v2070
        %v2072 = vsel %vm1849, %v1998, 0.0
        %v2073 = vadd.f32 %v2071, %v2072
        %v2074 = vsel %vm1849, %v1999, 0.0
        %v2075 = vadd.f32 %v2073, %v2074
        %v2076 = vsel %vm1849, %v2000, 0.0
        %v2077 = vadd.f32 %v2075, %v2076
        %v2078 = vsel %vm1849, %v2001, 0.0
        %v2079 = vadd.f32 %v2077, %v2078
        %v2080 = vsel %vm1849, %v2002, 0.0
        %v2081 = vadd.f32 %v2079, %v2080
        %v2082 = vsel %vm1849, %v2003, 0.0
        %v2083 = vadd.f32 %v2081, %v2082
        %v2084 = vsel %vm1849, %v2004, 0.0
        %v2085 = vadd.f32 %v2083, %v2084
        %v2086 = vsel %vm1849, %v2005, 0.0
        %v2087 = vadd.f32 %v2085, %v2086
        %v2088 = vsel %vm1849, %v2006, 0.0
        %v2089 = vadd.f32 %v2087, %v2088
        %v2090 = vsel %vm1849, %v2007, 0.0
        %v2091 = vadd.f32 %v2089, %v2090
        %v2092 = vsel %vm1849, %v2008, 0.0
        %v2093 = vadd.f32 %v2091, %v2092
        %v2094 = vsel %vm1849, %v2009, 0.0
        %v2095 = vadd.f32 %v2093, %v2094
        %v2096 = vsel %vm1849, %v2010, 0.0
        %v2097 = vadd.f32 %v2095, %v2096
        %v2098 = vsel %vm1849, %v2011, 0.0
        %v2099 = vadd.f32 %v2097, %v2098
        %v2100 = vsel %vm1849, %v2012, 0.0
        %v2101 = vadd.f32 %v2099, %v2100
        %v2102 = vsel %vm1849, %v2013, 0.0
        %v2103 = vadd.f32 %v2101, %v2102
        %v2104 = vsel %vm1849, %v2014, 0.0
        %v2105 = vadd.f32 %v2103, %v2104
        %v2106 = vsel %vm1849, %v2015, 0.0
        %v2107 = vadd.f32 %v2105, %v2106
        %v2108 = vsel %vm1849, %v2016, 0.0
        %v2109 = vadd.f32 %v2107, %v2108
        %v2110 = vsel %vm1849, %v2017, 0.0
        %v2111 = vadd.f32 %v2109, %v2110
        %v2112 = vsel %vm1849, %v2018, 0.0
        %v2113 = vadd.f32 %v2111, %v2112
        %v2114 = vsel %vm1849, %v2019, 0.0
        %v2115 = vadd.f32 %v2113, %v2114
        %v2116 = vsel %vm1849, %v2020, 0.0
        %v2117 = vadd.f32 %v2115, %v2116
        %v2118 = vsel %vm1849, %v2021, 0.0
        %v2119 = vadd.f32 %v2117, %v2118
        %v2120 = vsel %vm1849, %v2022, 0.0
        %v2121 = vadd.f32 %v2119, %v2120
        %v2122 = vsel %vm1849, %v2023, 0.0
        %v2123 = vadd.f32 %v2121, %v2122
        %v2124 = vsel %vm1849, %v2024, 0.0
        %v2125 = vadd.f32 %v2123, %v2124
        %v2126 = vsel %vm1849, %v2025, 0.0
        %v2127 = vadd.f32 %v2125, %v2126
        %v2128 = vsel %vm1849, %v2026, 0.0
        %v2129 = vadd.f32 %v2127, %v2128
        %v2130 = vsel %vm1849, %v2027, 0.0
        %v2131 = vadd.f32 %v2129, %v2130
        %v2132 = vsel %vm1849, %v2028, 0.0
        %v2133 = vadd.f32 %v2131, %v2132
        %v2134 = vsel %vm1849, %v2029, 0.0
        %v2135 = vadd.f32 %v2133, %v2134
        %v2136 = vsel %vm1849, %v2030, 0.0
        %v2137 = vadd.f32 %v2135, %v2136
        %v2138 = vsel %vm1849, %v2031, 0.0
        %v2139 = vadd.f32 %v2137, %v2138
        %v2140 = vsel %vm1849, %v2032, 0.0
        %v2141 = vadd.f32 %v2139, %v2140
        %v2142 = vsel %vm1849, %v2033, 0.0
        %v2143 = vadd.f32 %v2141, %v2142
        %v2144 = vsel %vm1849, %v2034, 0.0
        %v2145 = vadd.f32 %v2143, %v2144
        %v2146 = vsel %vm1849, %v2035, 0.0
        %v2147 = vadd.f32 %v2145, %v2146
        %v2148 = vsel %vm1849, %v2036, 0.0
        %v2149 = vadd.f32 %v2147, %v2148
        %v2150 = vsel %vm1849, %v2037, 0.0
        %v2151 = vadd.f32 %v2149, %v2150
        %v2152 = vsel %vm1849, %v2038, 0.0
        %v2153 = vadd.f32 %v2151, %v2152
        %v2154 = vsel %vm1849, %v2039, 0.0
        %v2155 = vadd.f32 %v2153, %v2154
        %v2156 = vsel %vm1849, %v2040, 0.0
        %v2157 = vadd.f32 %v2155, %v2156
        %v2158 = vsel %vm1849, %v2041, 0.0
        %v2159 = vadd.f32 %v2157, %v2158
        %v2160 = vsel %vm1849, %v2042, 0.0
        %v2161 = vadd.f32 %v2159, %v2160
        %v2162 = vsel %vm1849, %v2043, 0.0
        %v2163 = vadd.f32 %v2161, %v2162
        %v2164 = vsel %vm1849, %v2044, 0.0
        %v2165 = vadd.f32 %v2163, %v2164
        %v2166 = vsel %vm1849, %v2045, 0.0
        %v2167 = vadd.f32 %v2165, %v2166
        %v2168 = vsel %vm1849, %v2046, 0.0
        %v2169 = vadd.f32 %v2167, %v2168
        %v2170 = vsel %vm1849, %v2047, 0.0
        %v2171 = vadd.f32 %v2169, %v2170
        %v2172 = vsel %vm1849, %v2048, 0.0
        %v2173 = vadd.f32 %v2171, %v2172
        %v2174 = vsel %vm1849, %v2049, 0.0
        %v2175 = vadd.f32 %v2173, %v2174
        %v2176 = vsel %vm1849, %v2050, 0.0
        %v2177 = vadd.f32 %v2175, %v2176
        %v2178 = vrot.slane %v2177, 4
        %v2179 = vadd.f32 %v2177, %v2178
        %v2180 = vrot.slane %v2179, 2
        %v2181 = vadd.f32 %v2179, %v2180
        %v2182 = vrot.slane %v2181, 1
        %v2183 = vadd.f32 %v2181, %v2182
        %v2184 = vadd.f32 %v1986, %v2183
        %2185 = vst.msk [vmem:[#allocation2 + $0x1] sm:$0x1] %vm1984, %v2184
        %v2186 = vld [vmem:[#allocation2 + $0x2] sm:$0x1]
        %v2187 = vsel %vm1849, %v1784, 0.0
        %v2188 = vsel %vm1849, %v1785, 0.0
        %v2189 = vadd.f32 %v2187, %v2188
        %v2190 = vsel %vm1849, %v1786, 0.0
        %v2191 = vadd.f32 %v2189, %v2190
        %v2192 = vsel %vm1849, %v1787, 0.0
        %v2193 = vadd.f32 %v2191, %v2192
        %v2194 = vsel %vm1849, %v1788, 0.0
        %v2195 = vadd.f32 %v2193, %v2194
        %v2196 = vsel %vm1849, %v1789, 0.0
        %v2197 = vadd.f32 %v2195, %v2196
        %v2198 = vsel %vm1849, %v1790, 0.0
        %v2199 = vadd.f32 %v2197, %v2198
        %v2200 = vsel %vm1849, %v1791, 0.0
        %v2201 = vadd.f32 %v2199, %v2200
        %v2202 = vsel %vm1849, %v1792, 0.0
        %v2203 = vadd.f32 %v2201, %v2202
        %v2204 = vsel %vm1849, %v1793, 0.0
        %v2205 = vadd.f32 %v2203, %v2204
        %v2206 = vsel %vm1849, %v1794, 0.0
        %v2207 = vadd.f32 %v2205, %v2206
        %v2208 = vsel %vm1849, %v1795, 0.0
        %v2209 = vadd.f32 %v2207, %v2208
        %v2210 = vsel %vm1849, %v1796, 0.0
        %v2211 = vadd.f32 %v2209, %v2210
        %v2212 = vsel %vm1849, %v1797, 0.0
        %v2213 = vadd.f32 %v2211, %v2212
        %v2214 = vsel %vm1849, %v1798, 0.0
        %v2215 = vadd.f32 %v2213, %v2214
        %v2216 = vsel %vm1849, %v1799, 0.0
        %v2217 = vadd.f32 %v2215, %v2216
        %v2218 = vsel %vm1849, %v1800, 0.0
        %v2219 = vadd.f32 %v2217, %v2218
        %v2220 = vsel %vm1849, %v1801, 0.0
        %v2221 = vadd.f32 %v2219, %v2220
        %v2222 = vsel %vm1849, %v1802, 0.0
        %v2223 = vadd.f32 %v2221, %v2222
        %v2224 = vsel %vm1849, %v1803, 0.0
        %v2225 = vadd.f32 %v2223, %v2224
        %v2226 = vsel %vm1849, %v1804, 0.0
        %v2227 = vadd.f32 %v2225, %v2226
        %v2228 = vsel %vm1849, %v1805, 0.0
        %v2229 = vadd.f32 %v2227, %v2228
        %v2230 = vsel %vm1849, %v1806, 0.0
        %v2231 = vadd.f32 %v2229, %v2230
        %v2232 = vsel %vm1849, %v1807, 0.0
        %v2233 = vadd.f32 %v2231, %v2232
        %v2234 = vsel %vm1849, %v1808, 0.0
        %v2235 = vadd.f32 %v2233, %v2234
        %v2236 = vsel %vm1849, %v1809, 0.0
        %v2237 = vadd.f32 %v2235, %v2236
        %v2238 = vsel %vm1849, %v1810, 0.0
        %v2239 = vadd.f32 %v2237, %v2238
        %v2240 = vsel %vm1849, %v1811, 0.0
        %v2241 = vadd.f32 %v2239, %v2240
        %v2242 = vsel %vm1849, %v1812, 0.0
        %v2243 = vadd.f32 %v2241, %v2242
        %v2244 = vsel %vm1849, %v1813, 0.0
        %v2245 = vadd.f32 %v2243, %v2244
        %v2246 = vsel %vm1849, %v1814, 0.0
        %v2247 = vadd.f32 %v2245, %v2246
        %v2248 = vsel %vm1849, %v1815, 0.0
        %v2249 = vadd.f32 %v2247, %v2248
        %v2250 = vsel %vm1849, %v1816, 0.0
        %v2251 = vadd.f32 %v2249, %v2250
        %v2252 = vsel %vm1849, %v1817, 0.0
        %v2253 = vadd.f32 %v2251, %v2252
        %v2254 = vsel %vm1849, %v1818, 0.0
        %v2255 = vadd.f32 %v2253, %v2254
        %v2256 = vsel %vm1849, %v1819, 0.0
        %v2257 = vadd.f32 %v2255, %v2256
        %v2258 = vsel %vm1849, %v1820, 0.0
        %v2259 = vadd.f32 %v2257, %v2258
        %v2260 = vsel %vm1849, %v1821, 0.0
        %v2261 = vadd.f32 %v2259, %v2260
        %v2262 = vsel %vm1849, %v1822, 0.0
        %v2263 = vadd.f32 %v2261, %v2262
        %v2264 = vsel %vm1849, %v1823, 0.0
        %v2265 = vadd.f32 %v2263, %v2264
        %v2266 = vsel %vm1849, %v1824, 0.0
        %v2267 = vadd.f32 %v2265, %v2266
        %v2268 = vsel %vm1849, %v1825, 0.0
        %v2269 = vadd.f32 %v2267, %v2268
        %v2270 = vsel %vm1849, %v1826, 0.0
        %v2271 = vadd.f32 %v2269, %v2270
        %v2272 = vsel %vm1849, %v1827, 0.0
        %v2273 = vadd.f32 %v2271, %v2272
        %v2274 = vsel %vm1849, %v1828, 0.0
        %v2275 = vadd.f32 %v2273, %v2274
        %v2276 = vsel %vm1849, %v1829, 0.0
        %v2277 = vadd.f32 %v2275, %v2276
        %v2278 = vsel %vm1849, %v1830, 0.0
        %v2279 = vadd.f32 %v2277, %v2278
        %v2280 = vsel %vm1849, %v1831, 0.0
        %v2281 = vadd.f32 %v2279, %v2280
        %v2282 = vsel %vm1849, %v1832, 0.0
        %v2283 = vadd.f32 %v2281, %v2282
        %v2284 = vsel %vm1849, %v1833, 0.0
        %v2285 = vadd.f32 %v2283, %v2284
        %v2286 = vsel %vm1849, %v1834, 0.0
        %v2287 = vadd.f32 %v2285, %v2286
        %v2288 = vsel %vm1849, %v1835, 0.0
        %v2289 = vadd.f32 %v2287, %v2288
        %v2290 = vsel %vm1849, %v1836, 0.0
        %v2291 = vadd.f32 %v2289, %v2290
        %v2292 = vsel %vm1849, %v1837, 0.0
        %v2293 = vadd.f32 %v2291, %v2292
        %v2294 = vsel %vm1849, %v1838, 0.0
        %v2295 = vadd.f32 %v2293, %v2294
        %v2296 = vsel %vm1849, %v1839, 0.0
        %v2297 = vadd.f32 %v2295, %v2296
        %v2298 = vsel %vm1849, %v1840, 0.0
        %v2299 = vadd.f32 %v2297, %v2298
        %v2300 = vsel %vm1849, %v1841, 0.0
        %v2301 = vadd.f32 %v2299, %v2300
        %v2302 = vsel %vm1849, %v1842, 0.0
        %v2303 = vadd.f32 %v2301, %v2302
        %v2304 = vsel %vm1849, %v1843, 0.0
        %v2305 = vadd.f32 %v2303, %v2304
        %v2306 = vsel %vm1849, %v1844, 0.0
        %v2307 = vadd.f32 %v2305, %v2306
        %v2308 = vsel %vm1849, %v1845, 0.0
        %v2309 = vadd.f32 %v2307, %v2308
        %v2310 = vsel %vm1849, %v1846, 0.0
        %v2311 = vadd.f32 %v2309, %v2310
        %v2312 = vsel %vm1849, %v1847, 0.0
        %v2313 = vadd.f32 %v2311, %v2312
        %v2314 = vrot.slane %v2313, 4
        %v2315 = vadd.f32 %v2313, %v2314
        %v2316 = vrot.slane %v2315, 2
        %v2317 = vadd.f32 %v2315, %v2316
        %v2318 = vrot.slane %v2317, 1
        %v2319 = vadd.f32 %v2317, %v2318
        %v2320 = vadd.f32 %v2186, %v2319
        %2321 = vst.msk [vmem:[#allocation2 + $0x2] sm:$0x1] %vm1984, %v2320
        %v2322 = vld [vmem:[#allocation2 + $0x3] sm:$0x1]
        %v2323 = vmul.f32 %v1784, %v1784
        %v2324 = vmul.f32 %v1785, %v1785
        %v2325 = vmul.f32 %v1786, %v1786
        %v2326 = vmul.f32 %v1787, %v1787
        %v2327 = vmul.f32 %v1788, %v1788
        %v2328 = vmul.f32 %v1789, %v1789
        %v2329 = vmul.f32 %v1790, %v1790
        %v2330 = vmul.f32 %v1791, %v1791
        %v2331 = vmul.f32 %v1792, %v1792
        %v2332 = vmul.f32 %v1793, %v1793
        %v2333 = vmul.f32 %v1794, %v1794
        %v2334 = vmul.f32 %v1795, %v1795
        %v2335 = vmul.f32 %v1796, %v1796
        %v2336 = vmul.f32 %v1797, %v1797
        %v2337 = vmul.f32 %v1798, %v1798
        %v2338 = vmul.f32 %v1799, %v1799
        %v2339 = vmul.f32 %v1800, %v1800
        %v2340 = vmul.f32 %v1801, %v1801
        %v2341 = vmul.f32 %v1802, %v1802
        %v2342 = vmul.f32 %v1803, %v1803
        %v2343 = vmul.f32 %v1804, %v1804
        %v2344 = vmul.f32 %v1805, %v1805
        %v2345 = vmul.f32 %v1806, %v1806
        %v2346 = vmul.f32 %v1807, %v1807
        %v2347 = vmul.f32 %v1808, %v1808
        %v2348 = vmul.f32 %v1809, %v1809
        %v2349 = vmul.f32 %v1810, %v1810
        %v2350 = vmul.f32 %v1811, %v1811
        %v2351 = vmul.f32 %v1812, %v1812
        %v2352 = vmul.f32 %v1813, %v1813
        %v2353 = vmul.f32 %v1814, %v1814
        %v2354 = vmul.f32 %v1815, %v1815
        %v2355 = vmul.f32 %v1816, %v1816
        %v2356 = vmul.f32 %v1817, %v1817
        %v2357 = vmul.f32 %v1818, %v1818
        %v2358 = vmul.f32 %v1819, %v1819
        %v2359 = vmul.f32 %v1820, %v1820
        %v2360 = vmul.f32 %v1821, %v1821
        %v2361 = vmul.f32 %v1822, %v1822
        %v2362 = vmul.f32 %v1823, %v1823
        %v2363 = vmul.f32 %v1824, %v1824
        %v2364 = vmul.f32 %v1825, %v1825
        %v2365 = vmul.f32 %v1826, %v1826
        %v2366 = vmul.f32 %v1827, %v1827
        %v2367 = vmul.f32 %v1828, %v1828
        %v2368 = vmul.f32 %v1829, %v1829
        %v2369 = vmul.f32 %v1830, %v1830
        %v2370 = vmul.f32 %v1831, %v1831
        %v2371 = vmul.f32 %v1832, %v1832
        %v2372 = vmul.f32 %v1833, %v1833
        %v2373 = vmul.f32 %v1834, %v1834
        %v2374 = vmul.f32 %v1835, %v1835
        %v2375 = vmul.f32 %v1836, %v1836
        %v2376 = vmul.f32 %v1837, %v1837
        %v2377 = vmul.f32 %v1838, %v1838
        %v2378 = vmul.f32 %v1839, %v1839
        %v2379 = vmul.f32 %v1840, %v1840
        %v2380 = vmul.f32 %v1841, %v1841
        %v2381 = vmul.f32 %v1842, %v1842
        %v2382 = vmul.f32 %v1843, %v1843
        %v2383 = vmul.f32 %v1844, %v1844
        %v2384 = vmul.f32 %v1845, %v1845
        %v2385 = vmul.f32 %v1846, %v1846
        %v2386 = vmul.f32 %v1847, %v1847
        %v2387 = vsel %vm1849, %v2323, 0.0
        %v2388 = vsel %vm1849, %v2324, 0.0
        %v2389 = vadd.f32 %v2387, %v2388
        %v2390 = vsel %vm1849, %v2325, 0.0
        %v2391 = vadd.f32 %v2389, %v2390
        %v2392 = vsel %vm1849, %v2326, 0.0
        %v2393 = vadd.f32 %v2391, %v2392
        %v2394 = vsel %vm1849, %v2327, 0.0
        %v2395 = vadd.f32 %v2393, %v2394
        %v2396 = vsel %vm1849, %v2328, 0.0
        %v2397 = vadd.f32 %v2395, %v2396
        %v2398 = vsel %vm1849, %v2329, 0.0
        %v2399 = vadd.f32 %v2397, %v2398
        %v2400 = vsel %vm1849, %v2330, 0.0
        %v2401 = vadd.f32 %v2399, %v2400
        %v2402 = vsel %vm1849, %v2331, 0.0
        %v2403 = vadd.f32 %v2401, %v2402
        %v2404 = vsel %vm1849, %v2332, 0.0
        %v2405 = vadd.f32 %v2403, %v2404
        %v2406 = vsel %vm1849, %v2333, 0.0
        %v2407 = vadd.f32 %v2405, %v2406
        %v2408 = vsel %vm1849, %v2334, 0.0
        %v2409 = vadd.f32 %v2407, %v2408
        %v2410 = vsel %vm1849, %v2335, 0.0
        %v2411 = vadd.f32 %v2409, %v2410
        %v2412 = vsel %vm1849, %v2336, 0.0
        %v2413 = vadd.f32 %v2411, %v2412
        %v2414 = vsel %vm1849, %v2337, 0.0
        %v2415 = vadd.f32 %v2413, %v2414
        %v2416 = vsel %vm1849, %v2338, 0.0
        %v2417 = vadd.f32 %v2415, %v2416
        %v2418 = vsel %vm1849, %v2339, 0.0
        %v2419 = vadd.f32 %v2417, %v2418
        %v2420 = vsel %vm1849, %v2340, 0.0
        %v2421 = vadd.f32 %v2419, %v2420
        %v2422 = vsel %vm1849, %v2341, 0.0
        %v2423 = vadd.f32 %v2421, %v2422
        %v2424 = vsel %vm1849, %v2342, 0.0
        %v2425 = vadd.f32 %v2423, %v2424
        %v2426 = vsel %vm1849, %v2343, 0.0
        %v2427 = vadd.f32 %v2425, %v2426
        %v2428 = vsel %vm1849, %v2344, 0.0
        %v2429 = vadd.f32 %v2427, %v2428
        %v2430 = vsel %vm1849, %v2345, 0.0
        %v2431 = vadd.f32 %v2429, %v2430
        %v2432 = vsel %vm1849, %v2346, 0.0
        %v2433 = vadd.f32 %v2431, %v2432
        %v2434 = vsel %vm1849, %v2347, 0.0
        %v2435 = vadd.f32 %v2433, %v2434
        %v2436 = vsel %vm1849, %v2348, 0.0
        %v2437 = vadd.f32 %v2435, %v2436
        %v2438 = vsel %vm1849, %v2349, 0.0
        %v2439 = vadd.f32 %v2437, %v2438
        %v2440 = vsel %vm1849, %v2350, 0.0
        %v2441 = vadd.f32 %v2439, %v2440
        %v2442 = vsel %vm1849, %v2351, 0.0
        %v2443 = vadd.f32 %v2441, %v2442
        %v2444 = vsel %vm1849, %v2352, 0.0
        %v2445 = vadd.f32 %v2443, %v2444
        %v2446 = vsel %vm1849, %v2353, 0.0
        %v2447 = vadd.f32 %v2445, %v2446
        %v2448 = vsel %vm1849, %v2354, 0.0
        %v2449 = vadd.f32 %v2447, %v2448
        %v2450 = vsel %vm1849, %v2355, 0.0
        %v2451 = vadd.f32 %v2449, %v2450
        %v2452 = vsel %vm1849, %v2356, 0.0
        %v2453 = vadd.f32 %v2451, %v2452
        %v2454 = vsel %vm1849, %v2357, 0.0
        %v2455 = vadd.f32 %v2453, %v2454
        %v2456 = vsel %vm1849, %v2358, 0.0
        %v2457 = vadd.f32 %v2455, %v2456
        %v2458 = vsel %vm1849, %v2359, 0.0
        %v2459 = vadd.f32 %v2457, %v2458
        %v2460 = vsel %vm1849, %v2360, 0.0
        %v2461 = vadd.f32 %v2459, %v2460
        %v2462 = vsel %vm1849, %v2361, 0.0
        %v2463 = vadd.f32 %v2461, %v2462
        %v2464 = vsel %vm1849, %v2362, 0.0
        %v2465 = vadd.f32 %v2463, %v2464
        %v2466 = vsel %vm1849, %v2363, 0.0
        %v2467 = vadd.f32 %v2465, %v2466
        %v2468 = vsel %vm1849, %v2364, 0.0
        %v2469 = vadd.f32 %v2467, %v2468
        %v2470 = vsel %vm1849, %v2365, 0.0
        %v2471 = vadd.f32 %v2469, %v2470
        %v2472 = vsel %vm1849, %v2366, 0.0
        %v2473 = vadd.f32 %v2471, %v2472
        %v2474 = vsel %vm1849, %v2367, 0.0
        %v2475 = vadd.f32 %v2473, %v2474
        %v2476 = vsel %vm1849, %v2368, 0.0
        %v2477 = vadd.f32 %v2475, %v2476
        %v2478 = vsel %vm1849, %v2369, 0.0
        %v2479 = vadd.f32 %v2477, %v2478
        %v2480 = vsel %vm1849, %v2370, 0.0
        %v2481 = vadd.f32 %v2479, %v2480
        %v2482 = vsel %vm1849, %v2371, 0.0
        %v2483 = vadd.f32 %v2481, %v2482
        %v2484 = vsel %vm1849, %v2372, 0.0
        %v2485 = vadd.f32 %v2483, %v2484
        %v2486 = vsel %vm1849, %v2373, 0.0
        %v2487 = vadd.f32 %v2485, %v2486
        %v2488 = vsel %vm1849, %v2374, 0.0
        %v2489 = vadd.f32 %v2487, %v2488
        %v2490 = vsel %vm1849, %v2375, 0.0
        %v2491 = vadd.f32 %v2489, %v2490
        %v2492 = vsel %vm1849, %v2376, 0.0
        %v2493 = vadd.f32 %v2491, %v2492
        %v2494 = vsel %vm1849, %v2377, 0.0
        %v2495 = vadd.f32 %v2493, %v2494
        %v2496 = vsel %vm1849, %v2378, 0.0
        %v2497 = vadd.f32 %v2495, %v2496
        %v2498 = vsel %vm1849, %v2379, 0.0
        %v2499 = vadd.f32 %v2497, %v2498
        %v2500 = vsel %vm1849, %v2380, 0.0
        %v2501 = vadd.f32 %v2499, %v2500
        %v2502 = vsel %vm1849, %v2381, 0.0
        %v2503 = vadd.f32 %v2501, %v2502
        %v2504 = vsel %vm1849, %v2382, 0.0
        %v2505 = vadd.f32 %v2503, %v2504
        %v2506 = vsel %vm1849, %v2383, 0.0
        %v2507 = vadd.f32 %v2505, %v2506
        %v2508 = vsel %vm1849, %v2384, 0.0
        %v2509 = vadd.f32 %v2507, %v2508
        %v2510 = vsel %vm1849, %v2385, 0.0
        %v2511 = vadd.f32 %v2509, %v2510
        %v2512 = vsel %vm1849, %v2386, 0.0
        %v2513 = vadd.f32 %v2511, %v2512
        %v2514 = vrot.slane %v2513, 4
        %v2515 = vadd.f32 %v2513, %v2514
        %v2516 = vrot.slane %v2515, 2
        %v2517 = vadd.f32 %v2515, %v2516
        %v2518 = vrot.slane %v2517, 1
        %v2519 = vadd.f32 %v2517, %v2518
        %v2520 = vadd.f32 %v2322, %v2519
        %2521 = vst.msk [vmem:[#allocation2 + $0x3] sm:$0x1] %vm1984, %v2520
        // Predicated region
        $region37: #{tpu_custom_call.1} parent=31 // pred_check
          %p2522 = pneg %p191
        $region38: #{tpu_custom_call.1} parent=31 // pred_check_branch
          %2524 = sbr.rel (%p2522) target = $region40
        $region39: #{tpu_custom_call.1} parent=31 // pred_region
          %v2525 = vld [vmem:[#allocation2] sm:$0xf]
          %vm2526 = vcmask 257024
          %2527 = vst.msk [vmem:[%s181] sm:$0xf] %vm2526, %v2525
        $region40: #{tpu_custom_call.1} parent=31 // pred_fallthru
          _
        %s2528 = sand.u32 %s107, 1
        %s2529 = scalar_lea.sflag [#allocation4], %s2528
        %s2530 = sand.u32 %s107, 1
        %s2531 = smul.addr %s2530, 4
        %s2532 = scalar_lea.vmem [#allocation3], %s2531
        // Predicated region
        $region41: #{tpu_custom_call.1} parent=31 // pred_check
          %p2533 = pneg %p117
        $region42: #{tpu_custom_call.1} parent=31 // pred_check_branch
          %2535 = sbr.rel (%p2533) target = $region44
        $region43: #{tpu_custom_call.1} parent=31 // pred_region
          %s2537 = ssub.s32 64, 64
          %2538 = vsyncadd %s2529, %s2537
          %s2539 = smul.addr %s21, 64
          %s2540 = scalar_lea.hbm %s3, %s2539
          %s2542 = sshll.u32 %s2532, 4
          %s2543 = int_to_ptr.vmem [resolvable:$true] %s2542
          %2545 = dma.vmem_to_hbm [thread:$0]  %s2543, 64, %s2540, %s2529
        $region44: #{tpu_custom_call.1} parent=31 // pred_fallthru
          _
      $region32: #{tpu_custom_call.1} parent=5 // pred_fallthru
        _
      %p2546 = scmp.le.s32.totalorder 2, %s12
      // Predicated region
      $region45: #{tpu_custom_call.1} parent=5 // pred_check
        %p2547 = pneg %p2546
      $region46: #{tpu_custom_call.1} parent=5 // pred_check_branch
        %2549 = sbr.rel (%p2547) target = $region48
      $region47: #{tpu_custom_call.1} parent=5 // pred_region
        %s2550 = ssub.s32 %s12, 2
        // Predicated region
        $region49: #{tpu_custom_call.1} parent=47 // pred_check
          %p2551 = pneg %p123
        $region50: #{tpu_custom_call.1} parent=47 // pred_check_branch
          %2553 = sbr.rel (%p2551) target = $region52
        $region51: #{tpu_custom_call.1} parent=47 // pred_region
          %s2554 = sand.u32 %s108, 1
          %s2555 = scalar_lea.sflag [#allocation4], %s2554
          %s2556 = sand.u32 %s108, 1
          %s2557 = smul.addr %s2556, 4
          %s2558 = scalar_lea.vmem [#allocation3], %s2557
          %2559 = dma.done %s2555, 64
        $region52: #{tpu_custom_call.1} parent=47 // pred_fallthru
          _
      $region48: #{tpu_custom_call.1} parent=5 // pred_fallthru
        _
    $region6: #{tpu_custom_call.1} parent=1 // loop_footer
      %s16 = sadd.s32 1, %s12
    $region7: #{tpu_custom_call.1} parent=1 // loop_footer_branch
      %11 = sbr.rel target = $region3
    $region8: #{tpu_custom_call.1} parent=1 // loop_exit
      _
    %2560 = vsyncpa [#allocation4], 1
    %s2561 = scalar_lea.sflag [#allocation4], 1
    %2562 = vsyncpa %s2561, 1

</llo_original>
